<compile_context>
chip_gen: v5e
topology: v5e:2x2
jax: 0.10.0
libtpu: 0.0.40
codegen_flags: <defaults>
</compile_context>

<pallas_src>
import functools
import math

import jax
import jax.numpy as jnp
import numpy as np
from jax import lax
from jax.experimental import pallas as pl
from jax.experimental.pallas import tpu as pltpu


def _round_up(x, m):
    return ((x + m - 1) // m) * m


# ------------------------------- kernels --------------------------------------
def _nnmod_replica_kernel(*refs, n_mid, numel):
    """Replica pass over the (tiny, weight-only) stacked groups -> nml factor.

    refs:
      [0]                 h0_rep : (M_*h0, Q_)   layer-0 replica output (W0+b0 stacked)
      [1 : 1+2*n_mid]     Wbd_i, bbd_i           block-diag middle layers
      [1+2*n_mid : +2]    Wl, bl                 row-permuted block-diag last layer
      [-1]                nml    : (1, 1) f32    output
    """
    h0_ref = refs[0]
    mid = refs[1:1 + 2 * n_mid]
    wl_ref = refs[1 + 2 * n_mid]
    bl_ref = refs[2 + 2 * n_mid]
    nml_ref = refs[3 + 2 * n_mid]

    a = h0_ref[...]                                          # (M_*h0, Q_)
    for i in range(n_mid):
        a = jnp.maximum(a, 0.0)
        a = jnp.dot(mid[2 * i][...], a,
                    preferred_element_type=jnp.float32) + mid[2 * i + 1][...]
    a = jnp.maximum(a, 0.0)
    z = jnp.dot(wl_ref[...], a,
                preferred_element_type=jnp.float32) + bl_ref[...]
    ssq = jnp.sum(z * z, keepdims=True)                      # (1, 1)
    nml_ref[...] = lax.rsqrt(2.0 * ssq * (1.0 / numel))      # EUP rsqrt


def _nnmod_label_kernel(*refs, n_mid, M_, Q_):
    """One batch tile of the label pass, all groups packed block-diagonally.

    refs:
      [0]                 nml    : (1, 1) f32 in SMEM
      [1]                 labels : (M_, TN) int32 tile
      [2]                 H0bd   : (M_*h0, M_*Q_)  block-diag layer 0 (bias folded)
      [3 : 3+2*n_mid]     Wbd_i, bbd_i             block-diag middle layers
      [3+2*n_mid : +2]    Wl, bl                   row-permuted last layer
      [-1]                out    : (2M, TN) f32 tile
    """
    nml_ref, labels_ref, h0bd_ref = refs[0], refs[1], refs[2]
    mid = refs[3:3 + 2 * n_mid]
    wl_ref = refs[3 + 2 * n_mid]
    bl_ref = refs[4 + 2 * n_mid]
    out_ref = refs[5 + 2 * n_mid]

    tn = labels_ref.shape[1]
    rows = M_ * Q_

    # Stacked one-hot (M_*Q_, TN): row m*Q_ + label[m, n] is 1 in column n.
    r_iota = lax.broadcasted_iota(jnp.int32, (rows, tn), 0)
    oh = None
    for m in range(M_):
        tgt = labels_ref[m:m + 1, :] + (m * Q_)              # (1, TN)
        hit = jnp.where(r_iota == tgt, 1.0, 0.0)
        oh = hit if oh is None else oh + hit                 # (M_*Q_, TN) f32

    # Layer 0 (bias already folded into H0bd), then middle layers, then the
    # row-permuted last layer with nml folded into its (tiny) weights.
    a = jnp.dot(h0bd_ref[...], oh, preferred_element_type=jnp.float32)
    for i in range(n_mid):
        a = jnp.maximum(a, 0.0)
        a = jnp.dot(mid[2 * i][...], a,
                    preferred_element_type=jnp.float32) + mid[2 * i + 1][...]
    a = jnp.maximum(a, 0.0)

    s = nml_ref[0, 0]                                        # scalar from SMEM
    z = jnp.dot(wl_ref[...] * s, a,
                preferred_element_type=jnp.float32) + bl_ref[...] * s
    out_ref[...] = z                                         # one bulk store


# ------------------------------ weight packing --------------------------------
def _pack_params(Wlist, blist, *, ncons, M_, out_dim):
    """Build block-diagonal, pre-transposed, layout-permuted weights (once)."""
    n_layers = len(Wlist)
    assert n_layers >= 2, "hidden_depth >= 1 expected"  # TODO(synk): depth-0 case
    Q_ = Wlist[0].shape[1]
    h0 = Wlist[0].shape[2]
    cons = [(m if ncons > 1 else 0) for m in range(M_)]

    # Layer 0: bias folded (one-hot rows sum to 1), transposed, block-diag.
    h0_blocks = [jnp.transpose(Wlist[0][c]) + jnp.transpose(blist[0][c])
                 for c in cons]                               # each (h0, Q_)
    H0bd = jnp.zeros((M_ * h0, M_ * Q_), jnp.float32)
    for m, blk in enumerate(h0_blocks):
        H0bd = H0bd.at[m * h0:(m + 1) * h0, m * Q_:(m + 1) * Q_].set(blk)
    h0_rep = jnp.concatenate(h0_blocks, axis=0)               # (M_*h0, Q_)

    # Middle layers 1 .. L-2: transposed block-diag weights + stacked biases.
    mids = []
    for i in range(1, n_layers - 1):
        din, dout = Wlist[i].shape[1], Wlist[i].shape[2]
        Wbd = jnp.zeros((M_ * dout, M_ * din), jnp.float32)
        bbd = jnp.zeros((M_ * dout, 1), jnp.float32)
        for m, c in enumerate(cons):
            Wbd = Wbd.at[m * dout:(m + 1) * dout,
                         m * din:(m + 1) * din].set(jnp.transpose(Wlist[i][c]))
            bbd = bbd.at[m * dout:(m + 1) * dout, :].set(jnp.transpose(blist[i][c]))
        mids.append((Wbd, bbd))

    # Last layer: rows permuted so output row r = d*M_ + m, matching
    # x.permute(2,0,1).reshape(2M, N).
    din = Wlist[-1].shape[1]
    Wl = jnp.zeros((out_dim * M_, M_ * din), jnp.float32)
    bl = jnp.zeros((out_dim * M_, 1), jnp.float32)
    for m, c in enumerate(cons):
        Wl = Wl.at[m::M_, m * din:(m + 1) * din].set(jnp.transpose(Wlist[-1][c]))
        bl = bl.at[m::M_, :].set(jnp.transpose(blist[-1][c]))

    return h0_rep, H0bd, tuple(mids), Wl, bl


# ------------------------------ forward wrapper --------------------------------
@functools.partial(jax.jit, static_argnames=("M_", "Q_", "out_dim", "tn"))
def nnmod_forward(label, h0_rep, H0bd, mids, Wl, bl, *, M_, Q_, out_dim, tn=512):
    """Full NNMOD forward. Returns ((2*M, N) output, nml_fact scalar)."""
    n = label.shape[1]
    rows_out = out_dim * M_
    n_mid = len(mids)
    numel = float(M_ * Q_ * out_dim)
    vmem = pltpu.MemorySpace.VMEM
    smem = pltpu.MemorySpace.SMEM

    # ---- 1) replica pass: tiny gridless kernel -> (1,1) normalization factor.
    rep_args = [h0_rep]
    for Wbd, bbd in mids:
        rep_args += [Wbd, bbd]
    rep_args += [Wl, bl]
    nml = pl.pallas_call(
        functools.partial(_nnmod_replica_kernel, n_mid=n_mid, numel=numel),
        out_shape=jax.ShapeDtypeStruct((1, 1), jnp.float32),
        in_specs=[pl.BlockSpec(memory_space=vmem) for _ in rep_args],
        out_specs=pl.BlockSpec(memory_space=vmem),
    )(*rep_args)

    # ---- 2) label pass: 1-D grid over batch tiles, megacore-parallel.
    tile_n = min(tn, _round_up(n, 128))
    grid = (pl.cdiv(n, tile_n),)

    args = [nml, label.astype(jnp.int32), H0bd]
    for Wbd, bbd in mids:
        args += [Wbd, bbd]
    args += [Wl, bl]

    def full_spec(x):  # whole (tiny) weight array, fetched once
        return pl.BlockSpec(x.shape, lambda j: (0,) * x.ndim)

    in_specs = [pl.BlockSpec(memory_space=smem),                 # nml scalar
                pl.BlockSpec((M_, tile_n), lambda j: (0, j)),    # label tile
                full_spec(H0bd)]
    for Wbd, bbd in mids:
        in_specs += [full_spec(Wbd), full_spec(bbd)]
    in_specs += [full_spec(Wl), full_spec(bl)]

    out = pl.pallas_call(
        functools.partial(_nnmod_label_kernel, n_mid=n_mid, M_=M_, Q_=Q_),
        grid=grid,
        out_shape=jax.ShapeDtypeStruct((rows_out, n), jnp.float32),
        in_specs=in_specs,
        out_specs=pl.BlockSpec((rows_out, tile_n), lambda j: (0, j)),
        compiler_params=pltpu.CompilerParams(
            dimension_semantics=("parallel",),
            vmem_limit_bytes=32 * 1024 * 1024),
    )(*args)

    return out, nml[0, 0]


# ----------------------------- module port ------------------------------------
class NNMODPallas:
    def __init__(self, SIM, key, batch_tile=256):
        self.SIM = SIM
        self.batch_tile = batch_tile
        self.hidden_depth = SIM.hidden_depth
        self.M_ = int(SIM.M / SIM.num_joint_ant)
        self.Q_ = int(SIM.Q_ant ** SIM.num_joint_ant)
        self.out_dim = int(2 * SIM.num_joint_ant)
        # kept only for the pure-JAX reference check
        self.label_rep = jnp.broadcast_to(
            jnp.arange(self.Q_, dtype=jnp.int32), (self.M_, self.Q_))
        layers_dim = ([self.Q_] + [SIM.hidden_dim] * SIM.hidden_depth
                      + [self.out_dim])
        self.ncons = self.M_ if SIM.ind_cons else 1

        self.Wlist, self.blist = [], []
        for i in range(SIM.hidden_depth + 1):
            ninput, noutput = layers_dim[i], layers_dim[i + 1]
            lim = math.sqrt(6.0 / ninput)
            key, kw, kb = jax.random.split(key, 3)
            self.Wlist.append(jax.random.uniform(
                kw, (self.ncons, ninput, noutput), jnp.float32, -lim, lim))
            self.blist.append(jax.random.uniform(
                kb, (self.ncons, 1, noutput), jnp.float32, -lim, lim))

        # Block-diagonal / permuted weights built once (params fixed here).
        (self.h0_rep, self.H0bd, self.mids, self.Wl, self.bl) = _pack_params(
            self.Wlist, self.blist, ncons=self.ncons, M_=self.M_,
            out_dim=self.out_dim)

    def forward(self, label):
        # set_replica() + _forward(label): replica kernel + gridded label kernel.
        out, nml = nnmod_forward(label, self.h0_rep, self.H0bd, self.mids,
                                 self.Wl, self.bl, M_=self.M_, Q_=self.Q_,
                                 out_dim=self.out_dim, tn=self.batch_tile)
        self.nml_fact = nml
        return out


# ------------------------------ reference -------------------------------------
def ref_forward(label, label_rep, Wlist, blist, Q_, M):
    def mlp(lab):
        x = jax.nn.one_hot(lab, Q_, dtype=jnp.float32)
        for i in range(len(Wlist) - 1):
            x = jnp.maximum(jnp.matmul(x, Wlist[i]) + blist[i], 0.0)
        x = jnp.matmul(x, Wlist[-1]) + blist[-1]
        return jnp.transpose(x, (2, 0, 1)).reshape(2 * M, -1)

    x_rep = mlp(label_rep)
    nml = 1.0 / jnp.sqrt(2.0 * jnp.mean(x_rep ** 2))
    return mlp(label) * nml


# -------------------------------- main -----------------------------------------
if __name__ == "__main__":
    class _SIM:
        pass

    sim = _SIM()
    sim.M = 8
    sim.num_joint_ant = 2
    sim.Q_ant = 4          # Q_ = 16
    sim.hidden_dim = 32
    sim.hidden_depth = 2
    sim.ind_cons = True    # ncons = M_ = 4

    key = jax.random.PRNGKey(0)
    key_params, key_label = jax.random.split(key)
    model = NNMODPallas(sim, key_params, batch_tile=256)

    M_ = sim.M // sim.num_joint_ant
    N = 1024               # 4 batch tiles of 256 -> exercises grid + pipeline
    label = jax.random.randint(key_label, (M_, N), 0, model.Q_, dtype=jnp.int32)

    out = model.forward(label)
    out = jax.block_until_ready(out)

    ref = ref_forward(label, model.label_rep, model.Wlist, model.blist,
                      model.Q_, sim.M)
    ref = jax.block_until_ready(ref)

    assert out.shape == (2 * sim.M, N), out.shape
    np.testing.assert_allclose(np.asarray(out), np.asarray(ref),
                               rtol=5e-2, atol=5e-2)
    print("KERNEL_OK")
</pallas_src>

<mosaic_0001>
module attributes {stable_mosaic.version = 11 : i64} {
  func.func @_nnmod_label_kernel(%arg0: i32, %arg1: memref<1x1xf32, #tpu.memory_space<smem>>, %arg2: memref<4x256xi32, #tpu.memory_space<vmem>>, %arg3: memref<128x64xf32, #tpu.memory_space<vmem>>, %arg4: memref<128x128xf32, #tpu.memory_space<vmem>>, %arg5: memref<128x1xf32, #tpu.memory_space<vmem>>, %arg6: memref<16x128xf32, #tpu.memory_space<vmem>>, %arg7: memref<16x1xf32, #tpu.memory_space<vmem>>, %arg8: memref<16x256xf32, #tpu.memory_space<vmem>>) attributes {dimension_semantics = [#tpu.dimension_semantics<parallel>], iteration_bounds = array<i64: 4>, scalar_prefetch = 0 : i64, scratch_operands = 0 : i64, tpu.core_type = #tpu.core_type<tc>, window_params = [{transform_indices = @transform_0, window_bounds = array<i64: 1, 1>}, {transform_indices = @transform_1, window_bounds = array<i64: 4, 256>}, {pipeline_mode = #tpu.pipeline_mode<synchronous>, transform_indices = @transform_2, window_bounds = array<i64: 128, 64>}, {pipeline_mode = #tpu.pipeline_mode<synchronous>, transform_indices = @transform_3, window_bounds = array<i64: 128, 128>}, {pipeline_mode = #tpu.pipeline_mode<synchronous>, transform_indices = @transform_4, window_bounds = array<i64: 128, 1>}, {pipeline_mode = #tpu.pipeline_mode<synchronous>, transform_indices = @transform_5, window_bounds = array<i64: 16, 128>}, {pipeline_mode = #tpu.pipeline_mode<synchronous>, transform_indices = @transform_6, window_bounds = array<i64: 16, 1>}, {transform_indices = @transform_7, window_bounds = array<i64: 16, 256>}]} {
    %0 = tpu.iota {dimensions = array<i32: 0>} : vector<64x256xi32>
    %c0 = arith.constant 0 : index
    %c0_0 = arith.constant 0 : index
    %1 = vector.load %arg2[%c0, %c0_0] : memref<4x256xi32, #tpu.memory_space<vmem>>, vector<1x256xi32>
    %c0_i32 = arith.constant 0 : i32
    %2 = vector.broadcast %c0_i32 : i32 to vector<1x256xi32>
    %3 = arith.addi %1, %2 : vector<1x256xi32>
    %4 = vector.broadcast %3 : vector<1x256xi32> to vector<64x256xi32>
    %5 = arith.cmpi eq, %0, %4 : vector<64x256xi32>
    %cst = arith.constant 1.000000e+00 : f32
    %cst_1 = arith.constant 0.000000e+00 : f32
    %6 = vector.broadcast %cst : f32 to vector<64x256xf32>
    %7 = vector.broadcast %cst_1 : f32 to vector<64x256xf32>
    %8 = arith.select %5, %6, %7 : vector<64x256xi1>, vector<64x256xf32>
    %c1 = arith.constant 1 : index
    %c0_2 = arith.constant 0 : index
    %9 = vector.load %arg2[%c1, %c0_2] : memref<4x256xi32, #tpu.memory_space<vmem>>, vector<1x256xi32>
    %c16_i32 = arith.constant 16 : i32
    %10 = vector.broadcast %c16_i32 : i32 to vector<1x256xi32>
    %11 = arith.addi %9, %10 : vector<1x256xi32>
    %12 = vector.broadcast %11 : vector<1x256xi32> to vector<64x256xi32>
    %13 = arith.cmpi eq, %0, %12 : vector<64x256xi32>
    %cst_3 = arith.constant 1.000000e+00 : f32
    %cst_4 = arith.constant 0.000000e+00 : f32
    %14 = vector.broadcast %cst_3 : f32 to vector<64x256xf32>
    %15 = vector.broadcast %cst_4 : f32 to vector<64x256xf32>
    %16 = arith.select %13, %14, %15 : vector<64x256xi1>, vector<64x256xf32>
    %17 = arith.addf %8, %16 : vector<64x256xf32>
    %c2 = arith.constant 2 : index
    %c0_5 = arith.constant 0 : index
    %18 = vector.load %arg2[%c2, %c0_5] : memref<4x256xi32, #tpu.memory_space<vmem>>, vector<1x256xi32>
    %c32_i32 = arith.constant 32 : i32
    %19 = vector.broadcast %c32_i32 : i32 to vector<1x256xi32>
    %20 = arith.addi %18, %19 : vector<1x256xi32>
    %21 = vector.broadcast %20 : vector<1x256xi32> to vector<64x256xi32>
    %22 = arith.cmpi eq, %0, %21 : vector<64x256xi32>
    %cst_6 = arith.constant 1.000000e+00 : f32
    %cst_7 = arith.constant 0.000000e+00 : f32
    %23 = vector.broadcast %cst_6 : f32 to vector<64x256xf32>
    %24 = vector.broadcast %cst_7 : f32 to vector<64x256xf32>
    %25 = arith.select %22, %23, %24 : vector<64x256xi1>, vector<64x256xf32>
    %26 = arith.addf %17, %25 : vector<64x256xf32>
    %c3 = arith.constant 3 : index
    %c0_8 = arith.constant 0 : index
    %27 = vector.load %arg2[%c3, %c0_8] : memref<4x256xi32, #tpu.memory_space<vmem>>, vector<1x256xi32>
    %c48_i32 = arith.constant 48 : i32
    %28 = vector.broadcast %c48_i32 : i32 to vector<1x256xi32>
    %29 = arith.addi %27, %28 : vector<1x256xi32>
    %30 = vector.broadcast %29 : vector<1x256xi32> to vector<64x256xi32>
    %31 = arith.cmpi eq, %0, %30 : vector<64x256xi32>
    %cst_9 = arith.constant 1.000000e+00 : f32
    %cst_10 = arith.constant 0.000000e+00 : f32
    %32 = vector.broadcast %cst_9 : f32 to vector<64x256xf32>
    %33 = vector.broadcast %cst_10 : f32 to vector<64x256xf32>
    %34 = arith.select %31, %32, %33 : vector<64x256xi1>, vector<64x256xf32>
    %35 = arith.addf %26, %34 : vector<64x256xf32>
    %c0_11 = arith.constant 0 : index
    %c0_12 = arith.constant 0 : index
    %36 = vector.load %arg3[%c0_11, %c0_12] : memref<128x64xf32, #tpu.memory_space<vmem>>, vector<128x64xf32>
    %cst_13 = arith.constant dense<0.000000e+00> : vector<128x256xf32>
    %37 = tpu.matmul %36, %35, %cst_13 {dimension_numbers = #tpu.dot_dimension_numbers<[1], [0], [0], [1], [0, 0, 1, 1], [], []>} : vector<128x64xf32>, vector<64x256xf32>, vector<128x256xf32> -> vector<128x256xf32>
    %cst_14 = arith.constant 0.000000e+00 : f32
    %38 = vector.broadcast %cst_14 : f32 to vector<128x256xf32>
    %39 = arith.maximumf %37, %38 : vector<128x256xf32>
    %c0_15 = arith.constant 0 : index
    %c0_16 = arith.constant 0 : index
    %40 = vector.load %arg4[%c0_15, %c0_16] : memref<128x128xf32, #tpu.memory_space<vmem>>, vector<128x128xf32>
    %cst_17 = arith.constant dense<0.000000e+00> : vector<128x256xf32>
    %41 = tpu.matmul %40, %39, %cst_17 {dimension_numbers = #tpu.dot_dimension_numbers<[1], [0], [0], [1], [0, 0, 1, 1], [], []>} : vector<128x128xf32>, vector<128x256xf32>, vector<128x256xf32> -> vector<128x256xf32>
    %c0_18 = arith.constant 0 : index
    %c0_19 = arith.constant 0 : index
    %42 = vector.load %arg5[%c0_18, %c0_19] : memref<128x1xf32, #tpu.memory_space<vmem>>, vector<128x1xf32>
    %43 = vector.broadcast %42 : vector<128x1xf32> to vector<128x256xf32>
    %44 = arith.addf %41, %43 : vector<128x256xf32>
    %cst_20 = arith.constant 0.000000e+00 : f32
    %45 = vector.broadcast %cst_20 : f32 to vector<128x256xf32>
    %46 = arith.maximumf %44, %45 : vector<128x256xf32>
    %c0_21 = arith.constant 0 : index
    %c0_22 = arith.constant 0 : index
    %47 = memref.load %arg1[%c0_21, %c0_22] : memref<1x1xf32, #tpu.memory_space<smem>>
    %c0_23 = arith.constant 0 : index
    %c0_24 = arith.constant 0 : index
    %48 = vector.load %arg6[%c0_23, %c0_24] : memref<16x128xf32, #tpu.memory_space<vmem>>, vector<16x128xf32>
    %49 = vector.broadcast %47 : f32 to vector<16x128xf32>
    %50 = arith.mulf %48, %49 : vector<16x128xf32>
    %cst_25 = arith.constant dense<0.000000e+00> : vector<16x256xf32>
    %51 = tpu.matmul %50, %46, %cst_25 {dimension_numbers = #tpu.dot_dimension_numbers<[1], [0], [0], [1], [0, 0, 1, 1], [], []>} : vector<16x128xf32>, vector<128x256xf32>, vector<16x256xf32> -> vector<16x256xf32>
    %c0_26 = arith.constant 0 : index
    %c0_27 = arith.constant 0 : index
    %52 = vector.load %arg7[%c0_26, %c0_27] : memref<16x1xf32, #tpu.memory_space<vmem>>, vector<16x1xf32>
    %53 = vector.broadcast %47 : f32 to vector<16x1xf32>
    %54 = arith.mulf %52, %53 : vector<16x1xf32>
    %55 = vector.broadcast %54 : vector<16x1xf32> to vector<16x256xf32>
    %56 = arith.addf %51, %55 : vector<16x256xf32>
    %c0_28 = arith.constant 0 : index
    %c0_29 = arith.constant 0 : index
    %57 = vector.load %arg8[%c0_28, %c0_29] : memref<16x256xf32, #tpu.memory_space<vmem>>, vector<16x256xf32>
    tpu.vector_store %arg8[%c0_28, %c0_29], %56 {strides = array<i32>} : memref<16x256xf32, #tpu.memory_space<vmem>>, vector<16x256xf32>,
    return
  }
  func.func @transform_0(%arg0: i32) -> (i32, i32) {
    %c0_i32 = arith.constant 0 : i32
    %c0_i32_0 = arith.constant 0 : i32
    %c0_i32_1 = arith.constant 0 : i32
    return %c0_i32, %c0_i32_0 : i32, i32
  }
  func.func @transform_1(%arg0: i32) -> (i32, i32) {
    %c0_i32 = arith.constant 0 : i32
    %c0_i32_0 = arith.constant 0 : i32
    return %c0_i32, %arg0 : i32, i32
  }
  func.func @transform_2(%arg0: i32) -> (i32, i32) {
    %c0_i32 = arith.constant 0 : i32
    %c0_i32_0 = arith.constant 0 : i32
    %c0_i32_1 = arith.constant 0 : i32
    return %c0_i32, %c0_i32_0 : i32, i32
  }
  func.func @transform_3(%arg0: i32) -> (i32, i32) {
    %c0_i32 = arith.constant 0 : i32
    %c0_i32_0 = arith.constant 0 : i32
    %c0_i32_1 = arith.constant 0 : i32
    return %c0_i32, %c0_i32_0 : i32, i32
  }
  func.func @transform_4(%arg0: i32) -> (i32, i32) {
    %c0_i32 = arith.constant 0 : i32
    %c0_i32_0 = arith.constant 0 : i32
    %c0_i32_1 = arith.constant 0 : i32
    return %c0_i32, %c0_i32_0 : i32, i32
  }
  func.func @transform_5(%arg0: i32) -> (i32, i32) {
    %c0_i32 = arith.constant 0 : i32
    %c0_i32_0 = arith.constant 0 : i32
    %c0_i32_1 = arith.constant 0 : i32
    return %c0_i32, %c0_i32_0 : i32, i32
  }
  func.func @transform_6(%arg0: i32) -> (i32, i32) {
    %c0_i32 = arith.constant 0 : i32
    %c0_i32_0 = arith.constant 0 : i32
    %c0_i32_1 = arith.constant 0 : i32
    return %c0_i32, %c0_i32_0 : i32, i32
  }
  func.func @transform_7(%arg0: i32) -> (i32, i32) {
    %c0_i32 = arith.constant 0 : i32
    %c0_i32_0 = arith.constant 0 : i32
    return %c0_i32, %arg0 : i32, i32
  }
}

module attributes {stable_mosaic.version = 11 : i64} {
  func.func @_nnmod_replica_kernel(%arg0: memref<128x16xf32, #tpu.memory_space<vmem>>, %arg1: memref<128x128xf32, #tpu.memory_space<vmem>>, %arg2: memref<128x1xf32, #tpu.memory_space<vmem>>, %arg3: memref<16x128xf32, #tpu.memory_space<vmem>>, %arg4: memref<16x1xf32, #tpu.memory_space<vmem>>, %arg5: memref<1x1xf32, #tpu.memory_space<vmem>>) attributes {dimension_semantics = [], scalar_prefetch = 0 : i64, scratch_operands = 0 : i64, tpu.core_type = #tpu.core_type<tc>} {
    %c0 = arith.constant 0 : index
    %c0_0 = arith.constant 0 : index
    %0 = vector.load %arg0[%c0, %c0_0] : memref<128x16xf32, #tpu.memory_space<vmem>>, vector<128x16xf32>
    %cst = arith.constant 0.000000e+00 : f32
    %1 = vector.broadcast %cst : f32 to vector<128x16xf32>
    %2 = arith.maximumf %0, %1 : vector<128x16xf32>
    %c0_1 = arith.constant 0 : index
    %c0_2 = arith.constant 0 : index
    %3 = vector.load %arg1[%c0_1, %c0_2] : memref<128x128xf32, #tpu.memory_space<vmem>>, vector<128x128xf32>
    %cst_3 = arith.constant dense<0.000000e+00> : vector<128x16xf32>
    %4 = tpu.matmul %3, %2, %cst_3 {dimension_numbers = #tpu.dot_dimension_numbers<[1], [0], [0], [1], [0, 0, 1, 1], [], []>} : vector<128x128xf32>, vector<128x16xf32>, vector<128x16xf32> -> vector<128x16xf32>
    %c0_4 = arith.constant 0 : index
    %c0_5 = arith.constant 0 : index
    %5 = vector.load %arg2[%c0_4, %c0_5] : memref<128x1xf32, #tpu.memory_space<vmem>>, vector<128x1xf32>
    %6 = vector.broadcast %5 : vector<128x1xf32> to vector<128x16xf32>
    %7 = arith.addf %4, %6 : vector<128x16xf32>
    %cst_6 = arith.constant 0.000000e+00 : f32
    %8 = vector.broadcast %cst_6 : f32 to vector<128x16xf32>
    %9 = arith.maximumf %7, %8 : vector<128x16xf32>
    %c0_7 = arith.constant 0 : index
    %c0_8 = arith.constant 0 : index
    %10 = vector.load %arg3[%c0_7, %c0_8] : memref<16x128xf32, #tpu.memory_space<vmem>>, vector<16x128xf32>
    %cst_9 = arith.constant dense<0.000000e+00> : vector<16x16xf32>
    %11 = tpu.matmul %10, %9, %cst_9 {dimension_numbers = #tpu.dot_dimension_numbers<[1], [0], [0], [1], [0, 0, 1, 1], [], []>} : vector<16x128xf32>, vector<128x16xf32>, vector<16x16xf32> -> vector<16x16xf32>
    %c0_10 = arith.constant 0 : index
    %c0_11 = arith.constant 0 : index
    %12 = vector.load %arg4[%c0_10, %c0_11] : memref<16x1xf32, #tpu.memory_space<vmem>>, vector<16x1xf32>
    %13 = vector.broadcast %12 : vector<16x1xf32> to vector<16x16xf32>
    %14 = arith.addf %11, %13 : vector<16x16xf32>
    %15 = arith.mulf %14, %14 : vector<16x16xf32>
    %16 = vector.shape_cast %15 : vector<16x16xf32> to vector<1x16x16xf32>
    %cst_12 = arith.constant dense<0.000000e+00> : vector<1xf32>
    %17 = vector.multi_reduction <add>, %16, %cst_12 [1, 2] : vector<1x16x16xf32> to vector<1xf32>
    %18 = vector.shape_cast %17 : vector<1xf32> to vector<1x1x1xf32>
    %19 = vector.extract %18[0, 0, 0] : f32 from vector<1x1x1xf32>
    %20 = vector.broadcast %19 : f32 to vector<1x1xf32>
    %cst_13 = arith.constant 2.000000e+00 : f32
    %21 = vector.broadcast %cst_13 : f32 to vector<1x1xf32>
    %22 = arith.mulf %21, %20 : vector<1x1xf32>
    %cst_14 = arith.constant 3.906250e-03 : f32
    %23 = vector.broadcast %cst_14 : f32 to vector<1x1xf32>
    %24 = arith.mulf %22, %23 : vector<1x1xf32>
    %25 = math.rsqrt %24 : vector<1x1xf32>
    %c0_15 = arith.constant 0 : index
    %c0_16 = arith.constant 0 : index
    %26 = vector.load %arg5[%c0_15, %c0_16] : memref<1x1xf32, #tpu.memory_space<vmem>>, vector<1x1xf32>
    tpu.vector_store %arg5[%c0_15, %c0_16], %25 {strides = array<i32>} : memref<1x1xf32, #tpu.memory_space<vmem>>, vector<1x1xf32>,
    return
  }
}

</mosaic_0001>

<llo_original>
// kernel: nnmod_forward.2
$region0: #{nnmod_forward.2}
  #allocation0 [shape = 'u32[]', space=smem, size = 0x4, offset = 0x4, fixed_abs, tag = 'smem constant byte address 0x4 - core index']
  #allocation1 [shape = 'u32[72,128]{1,0:T(1,128)}', space=vmem, size = 0x9000, scoped, tag = 'internal scratch']
  %s0 = inlined_call_operand.vmem [shape: f32[128,16], index: 0, kind: input, shape index: {}]
  %s1 = inlined_call_operand.vmem [shape: f32[128,128], index: 1, kind: input, shape index: {}]
  %s2 = inlined_call_operand.vmem [shape: f32[128,1], index: 2, kind: input, shape index: {}]
  %s3 = inlined_call_operand.vmem [shape: f32[16,128], index: 3, kind: input, shape index: {}]
  %s4 = inlined_call_operand.vmem [shape: f32[16,1], index: 4, kind: input, shape index: {}]
  %s5 = inlined_call_operand.hbm [shape: f32[1,1], index: 5, kind: output, shape index: {}]
  %s6 = sld [smem:[#allocation0]]
  $region30: #{nnmod_forward.2} parent=0
    _
  %s8 = ssub.s32 1, %s6
  %s9 = scalar_select 0, %s8, %s6
  $region1: #{nnmod_forward.2} parent=0
    #allocation2 [shape = 'u8[512]{0}', space=vmem, size = 0x400, scoped, tag = 'output window, operand 0, single buffered']
    #allocation3 [shape = 's32[1]{0}', space=sflag, size = 0x4, scoped, tag = 'scoped memory for nnmod_forward.2']
    %10 = vsyncpa [#allocation3], 0
    // Predicated region
    $region2: #{nnmod_forward.2} parent=1 // pred_check
      _
    $region3: #{nnmod_forward.2} parent=1 // pred_check_branch
      %12 = sbr.rel (0) target = $region5
    $region4: #{nnmod_forward.2} parent=1 // pred_region
      _
    $region5: #{nnmod_forward.2} parent=1 // pred_fallthru
      _
    // Predicated region
    $region6: #{nnmod_forward.2} parent=1 // pred_check
      _
    $region7: #{nnmod_forward.2} parent=1 // pred_check_branch
      %14 = sbr.rel (0) target = $region9
    $region8: #{nnmod_forward.2} parent=1 // pred_region
      _
    $region9: #{nnmod_forward.2} parent=1 // pred_fallthru
      _
    // Predicated region
    $region10: #{nnmod_forward.2} parent=1 // pred_check
      _
    $region11: #{nnmod_forward.2} parent=1 // pred_check_branch
      %16 = sbr.rel (0) target = $region13
    $region12: #{nnmod_forward.2} parent=1 // pred_region
      _
    $region13: #{nnmod_forward.2} parent=1 // pred_fallthru
      _
    // Predicated region
    $region14: #{nnmod_forward.2} parent=1 // pred_check
      _
    $region15: #{nnmod_forward.2} parent=1 // pred_check_branch
      %18 = sbr.rel (0) target = $region17
    $region16: #{nnmod_forward.2} parent=1 // pred_region
      _
    $region17: #{nnmod_forward.2} parent=1 // pred_fallthru
      _
    // Predicated region
    $region18: #{nnmod_forward.2} parent=1 // pred_check
      _
    $region19: #{nnmod_forward.2} parent=1 // pred_check_branch
      %20 = sbr.rel (0) target = $region21
    $region20: #{nnmod_forward.2} parent=1 // pred_region
      _
    $region21: #{nnmod_forward.2} parent=1 // pred_fallthru
      _
    %v21 = vld [vmem:[%s0] sm:$0xff]
    %v22 = vld [vmem:[%s0 + $0x8] sm:$0xff]
    %v23 = vld [vmem:[%s0 + $0x10] sm:$0xff]
    %v24 = vld [vmem:[%s0 + $0x18] sm:$0xff]
    %v25 = vld [vmem:[%s0 + $0x20] sm:$0xff]
    %v26 = vld [vmem:[%s0 + $0x28] sm:$0xff]
    %v27 = vld [vmem:[%s0 + $0x30] sm:$0xff]
    %v28 = vld [vmem:[%s0 + $0x38] sm:$0xff]
    %v29 = vld [vmem:[%s0 + $0x40] sm:$0xff]
    %v30 = vld [vmem:[%s0 + $0x48] sm:$0xff]
    %v31 = vld [vmem:[%s0 + $0x50] sm:$0xff]
    %v32 = vld [vmem:[%s0 + $0x58] sm:$0xff]
    %v33 = vld [vmem:[%s0 + $0x60] sm:$0xff]
    %v34 = vld [vmem:[%s0 + $0x68] sm:$0xff]
    %v35 = vld [vmem:[%s0 + $0x70] sm:$0xff]
    %v36 = vld [vmem:[%s0 + $0x78] sm:$0xff]
    %v37 = vmax.f32 %v21, 0.0
    %v38 = vmax.f32 %v22, 0.0
    %v39 = vmax.f32 %v23, 0.0
    %v40 = vmax.f32 %v24, 0.0
    %v41 = vmax.f32 %v25, 0.0
    %v42 = vmax.f32 %v26, 0.0
    %v43 = vmax.f32 %v27, 0.0
    %v44 = vmax.f32 %v28, 0.0
    %v45 = vmax.f32 %v29, 0.0
    %v46 = vmax.f32 %v30, 0.0
    %v47 = vmax.f32 %v31, 0.0
    %v48 = vmax.f32 %v32, 0.0
    %v49 = vmax.f32 %v33, 0.0
    %v50 = vmax.f32 %v34, 0.0
    %v51 = vmax.f32 %v35, 0.0
    %v52 = vmax.f32 %v36, 0.0
    %v53 = vld [vmem:[%s1] sm:$0xff]
    %v54 = vld [vmem:[%s1 + $0x8] sm:$0xff]
    %v55 = vld [vmem:[%s1 + $0x10] sm:$0xff]
    %v56 = vld [vmem:[%s1 + $0x18] sm:$0xff]
    %v57 = vld [vmem:[%s1 + $0x20] sm:$0xff]
    %v58 = vld [vmem:[%s1 + $0x28] sm:$0xff]
    %v59 = vld [vmem:[%s1 + $0x30] sm:$0xff]
    %v60 = vld [vmem:[%s1 + $0x38] sm:$0xff]
    %v61 = vld [vmem:[%s1 + $0x40] sm:$0xff]
    %v62 = vld [vmem:[%s1 + $0x48] sm:$0xff]
    %v63 = vld [vmem:[%s1 + $0x50] sm:$0xff]
    %v64 = vld [vmem:[%s1 + $0x58] sm:$0xff]
    %v65 = vld [vmem:[%s1 + $0x60] sm:$0xff]
    %v66 = vld [vmem:[%s1 + $0x68] sm:$0xff]
    %v67 = vld [vmem:[%s1 + $0x70] sm:$0xff]
    %v68 = vld [vmem:[%s1 + $0x78] sm:$0xff]
    %v69 = vld [vmem:[%s2] sm:$0xff]
    %v70 = vld [vmem:[%s2 + $0x8] sm:$0xff]
    %v71 = vld [vmem:[%s2 + $0x10] sm:$0xff]
    %v72 = vld [vmem:[%s2 + $0x18] sm:$0xff]
    %v73 = vld [vmem:[%s2 + $0x20] sm:$0xff]
    %v74 = vld [vmem:[%s2 + $0x28] sm:$0xff]
    %v75 = vld [vmem:[%s2 + $0x30] sm:$0xff]
    %v76 = vld [vmem:[%s2 + $0x38] sm:$0xff]
    %v77 = vld [vmem:[%s2 + $0x40] sm:$0xff]
    %v78 = vld [vmem:[%s2 + $0x48] sm:$0xff]
    %v79 = vld [vmem:[%s2 + $0x50] sm:$0xff]
    %v80 = vld [vmem:[%s2 + $0x58] sm:$0xff]
    %v81 = vld [vmem:[%s2 + $0x60] sm:$0xff]
    %v82 = vld [vmem:[%s2 + $0x68] sm:$0xff]
    %v83 = vld [vmem:[%s2 + $0x70] sm:$0xff]
    %v84 = vld [vmem:[%s2 + $0x78] sm:$0xff]
    %86 = vset.pattern.permute.xlu0 0
    %87 = vperm.xlu0 %86, %v69
    %v88 = vpop.permute.xlu0 %87
    %91 = vset.pattern.permute.xlu0 0
    %92 = vperm.xlu0 %91, %v70
    %v93 = vpop.permute.xlu0 %92
    %96 = vset.pattern.permute.xlu0 0
    %97 = vperm.xlu0 %96, %v71
    %v98 = vpop.permute.xlu0 %97
    %101 = vset.pattern.permute.xlu0 0
    %102 = vperm.xlu0 %101, %v72
    %v103 = vpop.permute.xlu0 %102
    %106 = vset.pattern.permute.xlu0 0
    %107 = vperm.xlu0 %106, %v73
    %v108 = vpop.permute.xlu0 %107
    %111 = vset.pattern.permute.xlu0 0
    %112 = vperm.xlu0 %111, %v74
    %v113 = vpop.permute.xlu0 %112
    %116 = vset.pattern.permute.xlu0 0
    %117 = vperm.xlu0 %116, %v75
    %v118 = vpop.permute.xlu0 %117
    %121 = vset.pattern.permute.xlu0 0
    %122 = vperm.xlu0 %121, %v76
    %v123 = vpop.permute.xlu0 %122
    %126 = vset.pattern.permute.xlu0 0
    %127 = vperm.xlu0 %126, %v77
    %v128 = vpop.permute.xlu0 %127
    %131 = vset.pattern.permute.xlu0 0
    %132 = vperm.xlu0 %131, %v78
    %v133 = vpop.permute.xlu0 %132
    %136 = vset.pattern.permute.xlu0 0
    %137 = vperm.xlu0 %136, %v79
    %v138 = vpop.permute.xlu0 %137
    %141 = vset.pattern.permute.xlu0 0
    %142 = vperm.xlu0 %141, %v80
    %v143 = vpop.permute.xlu0 %142
    %146 = vset.pattern.permute.xlu0 0
    %147 = vperm.xlu0 %146, %v81
    %v148 = vpop.permute.xlu0 %147
    %151 = vset.pattern.permute.xlu0 0
    %152 = vperm.xlu0 %151, %v82
    %v153 = vpop.permute.xlu0 %152
    %156 = vset.pattern.permute.xlu0 0
    %157 = vperm.xlu0 %156, %v83
    %v158 = vpop.permute.xlu0 %157
    %161 = vset.pattern.permute.xlu0 0
    %162 = vperm.xlu0 %161, %v84
    %v163 = vpop.permute.xlu0 %162
    %165 = vmatpush.msra.mxu0 %v52
    %166 = vmatpush.msra.mxu0 %v51
    %167 = vmatpush.msra.mxu0 %v50
    %168 = vmatpush.msra.mxu0 %v49
    %169 = vmatpush.msra.mxu0 %v48
    %170 = vmatpush.msra.mxu0 %v47
    %171 = vmatpush.msra.mxu0 %v46
    %172 = vmatpush.msra.mxu0 %v45
    %173 = vmatpush.msra.mxu0 %v44
    %174 = vmatpush.msra.mxu0 %v43
    %175 = vmatpush.msra.mxu0 %v42
    %176 = vmatpush.msra.mxu0 %v41
    %177 = vmatpush.msra.mxu0 %v40
    %178 = vmatpush.msra.mxu0 %v39
    %179 = vmatpush.msra.mxu0 %v38
    %180 = vmatpush.msra.mxu0 %v37
    %181 = vmatmul.f32.gmra.mxu0 %v53
    %v182 = vpop.f32.mrf.mxu0
    %v183 = vadd.f32 %v88, %v182
    %184 = vmatmul.f32.gmra.mxu0 %v54
    %v185 = vpop.f32.mrf.mxu0
    %v186 = vadd.f32 %v93, %v185
    %187 = vmatmul.f32.gmra.mxu0 %v55
    %v188 = vpop.f32.mrf.mxu0
    %v189 = vadd.f32 %v98, %v188
    %190 = vmatmul.f32.gmra.mxu0 %v56
    %v191 = vpop.f32.mrf.mxu0
    %v192 = vadd.f32 %v103, %v191
    %193 = vmatmul.f32.gmra.mxu0 %v57
    %v194 = vpop.f32.mrf.mxu0
    %v195 = vadd.f32 %v108, %v194
    %196 = vmatmul.f32.gmra.mxu0 %v58
    %v197 = vpop.f32.mrf.mxu0
    %v198 = vadd.f32 %v113, %v197
    %199 = vmatmul.f32.gmra.mxu0 %v59
    %v200 = vpop.f32.mrf.mxu0
    %v201 = vadd.f32 %v118, %v200
    %202 = vmatmul.f32.gmra.mxu0 %v60
    %v203 = vpop.f32.mrf.mxu0
    %v204 = vadd.f32 %v123, %v203
    %205 = vmatmul.f32.gmra.mxu0 %v61
    %v206 = vpop.f32.mrf.mxu0
    %v207 = vadd.f32 %v128, %v206
    %208 = vmatmul.f32.gmra.mxu0 %v62
    %v209 = vpop.f32.mrf.mxu0
    %v210 = vadd.f32 %v133, %v209
    %211 = vmatmul.f32.gmra.mxu0 %v63
    %v212 = vpop.f32.mrf.mxu0
    %v213 = vadd.f32 %v138, %v212
    %214 = vmatmul.f32.gmra.mxu0 %v64
    %v215 = vpop.f32.mrf.mxu0
    %v216 = vadd.f32 %v143, %v215
    %217 = vmatmul.f32.gmra.mxu0 %v65
    %v218 = vpop.f32.mrf.mxu0
    %v219 = vadd.f32 %v148, %v218
    %220 = vmatmul.f32.gmra.mxu0 %v66
    %v221 = vpop.f32.mrf.mxu0
    %v222 = vadd.f32 %v153, %v221
    %223 = vmatmul.f32.gmra.mxu0 %v67
    %v224 = vpop.f32.mrf.mxu0
    %v225 = vadd.f32 %v158, %v224
    %226 = vmatmul.f32.gmra.mxu0 %v68
    %v227 = vpop.f32.mrf.mxu0
    %v228 = vadd.f32 %v163, %v227
    %229 = vdwg.mxu0
    %v230 = vmax.f32 %v183, 0.0
    %v231 = vmax.f32 %v186, 0.0
    %v232 = vmax.f32 %v189, 0.0
    %v233 = vmax.f32 %v192, 0.0
    %v234 = vmax.f32 %v195, 0.0
    %v235 = vmax.f32 %v198, 0.0
    %v236 = vmax.f32 %v201, 0.0
    %v237 = vmax.f32 %v204, 0.0
    %v238 = vmax.f32 %v207, 0.0
    %v239 = vmax.f32 %v210, 0.0
    %v240 = vmax.f32 %v213, 0.0
    %v241 = vmax.f32 %v216, 0.0
    %v242 = vmax.f32 %v219, 0.0
    %v243 = vmax.f32 %v222, 0.0
    %v244 = vmax.f32 %v225, 0.0
    %v245 = vmax.f32 %v228, 0.0
    %v246 = vld [vmem:[%s3] sm:$0xff]
    %v247 = vld [vmem:[%s3 + $0x8] sm:$0xff]
    %v248 = vld [vmem:[%s4] sm:$0xff]
    %v249 = vld [vmem:[%s4 + $0x8] sm:$0xff]
    %251 = vset.pattern.permute.xlu0 0
    %252 = vperm.xlu0 %251, %v248
    %v253 = vpop.permute.xlu0 %252
    %256 = vset.pattern.permute.xlu0 0
    %257 = vperm.xlu0 %256, %v249
    %v258 = vpop.permute.xlu0 %257
    %260 = vmatpush.msra.mxu0 %v245
    %261 = vmatpush.msra.mxu0 %v244
    %262 = vmatpush.msra.mxu0 %v243
    %263 = vmatpush.msra.mxu0 %v242
    %264 = vmatpush.msra.mxu0 %v241
    %265 = vmatpush.msra.mxu0 %v240
    %266 = vmatpush.msra.mxu0 %v239
    %267 = vmatpush.msra.mxu0 %v238
    %268 = vmatpush.msra.mxu0 %v237
    %269 = vmatpush.msra.mxu0 %v236
    %270 = vmatpush.msra.mxu0 %v235
    %271 = vmatpush.msra.mxu0 %v234
    %272 = vmatpush.msra.mxu0 %v233
    %273 = vmatpush.msra.mxu0 %v232
    %274 = vmatpush.msra.mxu0 %v231
    %275 = vmatpush.msra.mxu0 %v230
    %276 = vmatmul.f32.gmra.mxu0 %v246
    %v277 = vpop.f32.mrf.mxu0
    %v278 = vadd.f32 %v253, %v277
    %279 = vmatmul.f32.gmra.mxu0 %v247
    %v280 = vpop.f32.mrf.mxu0
    %v281 = vadd.f32 %v258, %v280
    %282 = vdwg.mxu0
    %v283 = vmul.f32 %v278, %v278
    %v284 = vmul.f32 %v281, %v281
    %vm285 = vcmask 130048
    %v286 = vsel %vm285, %v283, 0.0
    %v287 = vsel %vm285, %v284, 0.0
    %v288 = vadd.f32 %v286, %v287
    %289 = vadd.xlane.f32.xlu0 %v288
    %v290 = vpop.xlane.xlu0 %289
    %v291 = vrot.slane %v290, 4
    %v292 = vadd.f32 %v290, %v291
    %v293 = vrot.slane %v292, 2
    %v294 = vadd.f32 %v292, %v293
    %v295 = vrot.slane %v294, 1
    %v296 = vadd.f32 %v294, %v295
    %s297 = vtos %v296
    %v298 = vstv %s297
    %v299 = vmul.f32 %v298, 2.0
    %v300 = vmul.f32 %v299, 0.00390625
    %v301 = vrsqrt.pop %v300
    %v302 = vmul.f32 %v301, %v300
    %v303 = vmul.f32 %v302, %v301
    %v304 = vmul.f32 0.5, %v303
    %v305 = vsub.f32 1.5, %v304
    %v306 = vmul.f32 %v301, %v305
    %vm307 = vweird.f32 %v300
    %vm308 = vweird.f32 %v301
    %vm309 = vmor %vm307, %vm308
    %v310 = vsel %vm309, %v301, %v306
    %vm311 = vcmask 0
    %312 = vst.msk [vmem:[#allocation2] sm:$0x1] %vm311, %v310
    // Predicated region
    $region22: #{nnmod_forward.2} parent=1 // pred_check
      _
    $region23: #{nnmod_forward.2} parent=1 // pred_check_branch
      %314 = sbr.rel (0) target = $region25
    $region24: #{nnmod_forward.2} parent=1 // pred_region
      %316 = vsyncadd [#allocation3], 0
      %s318 = sshll.u32 [#allocation2], 4
      %s319 = int_to_ptr.vmem [resolvable:$true] %s318
      %s320 = sshll.u32 %s5, 4
      %s321 = int_to_ptr.hbm [resolvable:$true] %s320
      %323 = dma.vmem_to_hbm [thread:$0]  %s319, 16, %s321, [#allocation3]
    $region25: #{nnmod_forward.2} parent=1 // pred_fallthru
      _
    // Predicated region
    $region26: #{nnmod_forward.2} parent=1 // pred_check
      _
    $region27: #{nnmod_forward.2} parent=1 // pred_check_branch
      %325 = sbr.rel (0) target = $region29
    $region28: #{nnmod_forward.2} parent=1 // pred_region
      %327 = dma.done [#allocation3], 16
    $region29: #{nnmod_forward.2} parent=1 // pred_fallthru
      _
    %328 = vsyncpa [#allocation3], 1

// kernel: nnmod_forward.3
$region0: #{nnmod_forward.3}
  #allocation0 [shape = 'u32[]', space=smem, size = 0x4, offset = 0x4, fixed_abs, tag = 'smem constant byte address 0x4 - core index']
  #allocation1 [shape = 'u32[72,128]{1,0:T(1,128)}', space=vmem, size = 0x9000, scoped, tag = 'internal scratch']
  #allocation2 [shape = 'f32[1,1]{1,0:T(1,128)S(6)}', space=smem, size = 0x200, scoped, tag = 'scoped memory for nnmod_forward.3']
  %s0 = inlined_call_operand.<no memory space> [shape: f32[1,1], index: 0, kind: input, shape index: {}]
  %s1 = inlined_call_operand.vmem [shape: s32[4,1024], index: 1, kind: input, shape index: {}]
  %s2 = inlined_call_operand.vmem [shape: f32[128,64], index: 2, kind: input, shape index: {}]
  %s3 = inlined_call_operand.vmem [shape: f32[128,128], index: 3, kind: input, shape index: {}]
  %s4 = inlined_call_operand.vmem [shape: f32[128,1], index: 4, kind: input, shape index: {}]
  %s5 = inlined_call_operand.vmem [shape: f32[16,128], index: 5, kind: input, shape index: {}]
  %s6 = inlined_call_operand.vmem [shape: f32[16,1], index: 6, kind: input, shape index: {}]
  %s7 = inlined_call_operand.hbm [shape: f32[16,1024], index: 7, kind: output, shape index: {}]
  %s8 = sld [smem:[#allocation0]]
  $region61: #{nnmod_forward.3} parent=0
    _
  %s10 = ssub.s32 1, %s8
  %s11 = scalar_select 0, %s10, %s8
  %12 = sst [smem:[#allocation2]] %s0
  $region1: #{nnmod_forward.3} parent=0
    #allocation3 [shape = 'u8[32768]{0}', space=vmem, size = 0x8000, scoped, tag = 'output window, operand 0']
    #allocation4 [shape = 's32[2]{0}', space=sflag, size = 0x8, scoped, tag = 'scoped memory for nnmod_forward.3']
    %13 = vsyncpa [#allocation4], 0
    %s14 = scalar_lea.sflag [#allocation4], 1
    %15 = vsyncpa %s14, 0
    loop: start=0, step=1, limit=6
    $region2: #{nnmod_forward.3} parent=1 // loop_pre_header
      _
    $region3: #{nnmod_forward.3} parent=1 // loop_header
      %s17 = sphi 0, %s21
      %p18 = scmp.ge.s32.totalorder %s17, 6
      %s25 = sphi 0, %s25
      %s27 = sphi 0, %s25
      %s28 = sphi 0, %s27
      %s42 = sphi 0, %s28
      %s48 = sphi 0, %s50
      %s51 = sphi 0, %s48
      %s52 = sphi 0, %s51
      %s68 = sphi 0, %s52
      %s72 = sphi 0, %s72
      %s74 = sphi 0, %s72
      %s75 = sphi 0, %s74
      %s89 = sphi 0, %s75
      %s93 = sphi 0, %s93
      %s95 = sphi 0, %s93
      %s96 = sphi 0, %s95
      %s110 = sphi 0, %s96
      %s114 = sphi 0, %s114
      %s116 = sphi 0, %s114
      %s117 = sphi 0, %s116
      %s131 = sphi 0, %s117
      %s135 = sphi 0, %s135
      %s137 = sphi 0, %s135
      %s138 = sphi 0, %s137
      %s152 = sphi 0, %s138
      %s156 = sphi 0, %s156
      %s158 = sphi 0, %s156
      %s159 = sphi 0, %s158
      %s173 = sphi 0, %s159
      %s179 = sphi 0, %s181
      %s182 = sphi 0, %s179
      %s183 = sphi 0, %s182
      %s199 = sphi 0, %s183
    $region4: #{nnmod_forward.3} parent=1 // loop_header_branch
      %20 = sbr.rel (%p18) target = $region8
    $region5: #{nnmod_forward.3} parent=1 // loop_body
      %s22 = ssub.s32 %s17, 1
      %s23 = ssub.s32 %s17, 2
      %s24 = sadd.s32 %s17, 1
      %s26 = sadd.s32 %s25, 1
      %p29 = scmp.eq.s32.totalorder %s17, 3
      %p30 = scmp.ne.s32.totalorder %s25, %s27
      %p31 = scmp.eq.s32.totalorder %s17, 0
      %p32 = por %p30, %p31
      %p33 = scmp.ne.s32.totalorder %s25, %s27
      %p34 = scmp.eq.s32.totalorder %s22, 3
      %p35 = por %p33, %p34
      %p36 = scmp.ne.s32.totalorder %s27, %s28
      %p37 = scmp.eq.s32.totalorder %s22, 0
      %p38 = por %p36, %p37
      %p39 = scmp.ne.s32.totalorder %s27, %s28
      %p40 = scmp.eq.s32.totalorder %s23, 3
      %p41 = por %p39, %p40
      %p43 = scmp.ne.s32.totalorder %s28, %s42
      %p44 = scmp.eq.s32.totalorder %s23, 0
      %p45 = por %p43, %p44
      %s46 = ssub.s32 %s17, %s24
      %p47 = scmp.eq.s32.totalorder %s46, 0
      %s49 = sadd.s32 %s48, 1
      %s50 = scalar_select %p47, %s48, %s49
      %p53 = pneg %p47
      %p54 = scmp.eq.s32.totalorder %s17, 3
      %p55 = por %p53, %p54
      %p56 = scmp.ne.s32.totalorder %s48, %s51
      %p57 = scmp.eq.s32.totalorder %s17, 0
      %p58 = por %p56, %p57
      %p59 = scmp.ne.s32.totalorder %s48, %s51
      %p60 = scmp.eq.s32.totalorder %s22, 3
      %p61 = por %p59, %p60
      %p62 = scmp.ne.s32.totalorder %s51, %s52
      %p63 = scmp.eq.s32.totalorder %s22, 0
      %p64 = por %p62, %p63
      %p65 = scmp.ne.s32.totalorder %s51, %s52
      %p66 = scmp.eq.s32.totalorder %s23, 3
      %p67 = por %p65, %p66
      %p69 = scmp.ne.s32.totalorder %s52, %s68
      %p70 = scmp.eq.s32.totalorder %s23, 0
      %p71 = por %p69, %p70
      %s73 = sadd.s32 %s72, 1
      %p76 = scmp.eq.s32.totalorder %s17, 3
      %p77 = scmp.ne.s32.totalorder %s72, %s74
      %p78 = scmp.eq.s32.totalorder %s17, 0
      %p79 = por %p77, %p78
      %p80 = scmp.ne.s32.totalorder %s72, %s74
      %p81 = scmp.eq.s32.totalorder %s22, 3
      %p82 = por %p80, %p81
      %p83 = scmp.ne.s32.totalorder %s74, %s75
      %p84 = scmp.eq.s32.totalorder %s22, 0
      %p85 = por %p83, %p84
      %p86 = scmp.ne.s32.totalorder %s74, %s75
      %p87 = scmp.eq.s32.totalorder %s23, 3
      %p88 = por %p86, %p87
      %p90 = scmp.ne.s32.totalorder %s75, %s89
      %p91 = scmp.eq.s32.totalorder %s23, 0
      %p92 = por %p90, %p91
      %s94 = sadd.s32 %s93, 1
      %p97 = scmp.eq.s32.totalorder %s17, 3
      %p98 = scmp.ne.s32.totalorder %s93, %s95
      %p99 = scmp.eq.s32.totalorder %s17, 0
      %p100 = por %p98, %p99
      %p101 = scmp.ne.s32.totalorder %s93, %s95
      %p102 = scmp.eq.s32.totalorder %s22, 3
      %p103 = por %p101, %p102
      %p104 = scmp.ne.s32.totalorder %s95, %s96
      %p105 = scmp.eq.s32.totalorder %s22, 0
      %p106 = por %p104, %p105
      %p107 = scmp.ne.s32.totalorder %s95, %s96
      %p108 = scmp.eq.s32.totalorder %s23, 3
      %p109 = por %p107, %p108
      %p111 = scmp.ne.s32.totalorder %s96, %s110
      %p112 = scmp.eq.s32.totalorder %s23, 0
      %p113 = por %p111, %p112
      %s115 = sadd.s32 %s114, 1
      %p118 = scmp.eq.s32.totalorder %s17, 3
      %p119 = scmp.ne.s32.totalorder %s114, %s116
      %p120 = scmp.eq.s32.totalorder %s17, 0
      %p121 = por %p119, %p120
      %p122 = scmp.ne.s32.totalorder %s114, %s116
      %p123 = scmp.eq.s32.totalorder %s22, 3
      %p124 = por %p122, %p123
      %p125 = scmp.ne.s32.totalorder %s116, %s117
      %p126 = scmp.eq.s32.totalorder %s22, 0
      %p127 = por %p125, %p126
      %p128 = scmp.ne.s32.totalorder %s116, %s117
      %p129 = scmp.eq.s32.totalorder %s23, 3
      %p130 = por %p128, %p129
      %p132 = scmp.ne.s32.totalorder %s117, %s131
      %p133 = scmp.eq.s32.totalorder %s23, 0
      %p134 = por %p132, %p133
      %s136 = sadd.s32 %s135, 1
      %p139 = scmp.eq.s32.totalorder %s17, 3
      %p140 = scmp.ne.s32.totalorder %s135, %s137
      %p141 = scmp.eq.s32.totalorder %s17, 0
      %p142 = por %p140, %p141
      %p143 = scmp.ne.s32.totalorder %s135, %s137
      %p144 = scmp.eq.s32.totalorder %s22, 3
      %p145 = por %p143, %p144
      %p146 = scmp.ne.s32.totalorder %s137, %s138
      %p147 = scmp.eq.s32.totalorder %s22, 0
      %p148 = por %p146, %p147
      %p149 = scmp.ne.s32.totalorder %s137, %s138
      %p150 = scmp.eq.s32.totalorder %s23, 3
      %p151 = por %p149, %p150
      %p153 = scmp.ne.s32.totalorder %s138, %s152
      %p154 = scmp.eq.s32.totalorder %s23, 0
      %p155 = por %p153, %p154
      %s157 = sadd.s32 %s156, 1
      %p160 = scmp.eq.s32.totalorder %s17, 3
      %p161 = scmp.ne.s32.totalorder %s156, %s158
      %p162 = scmp.eq.s32.totalorder %s17, 0
      %p163 = por %p161, %p162
      %p164 = scmp.ne.s32.totalorder %s156, %s158
      %p165 = scmp.eq.s32.totalorder %s22, 3
      %p166 = por %p164, %p165
      %p167 = scmp.ne.s32.totalorder %s158, %s159
      %p168 = scmp.eq.s32.totalorder %s22, 0
      %p169 = por %p167, %p168
      %p170 = scmp.ne.s32.totalorder %s158, %s159
      %p171 = scmp.eq.s32.totalorder %s23, 3
      %p172 = por %p170, %p171
      %p174 = scmp.ne.s32.totalorder %s159, %s173
      %p175 = scmp.eq.s32.totalorder %s23, 0
      %p176 = por %p174, %p175
      %s177 = ssub.s32 %s17, %s24
      %p178 = scmp.eq.s32.totalorder %s177, 0
      %s180 = sadd.s32 %s179, 1
      %s181 = scalar_select %p178, %s179, %s180
      %p184 = pneg %p178
      %p185 = scmp.eq.s32.totalorder %s17, 3
      %p186 = por %p184, %p185
      %p187 = scmp.ne.s32.totalorder %s179, %s182
      %p188 = scmp.eq.s32.totalorder %s17, 0
      %p189 = por %p187, %p188
      %p190 = scmp.ne.s32.totalorder %s179, %s182
      %p191 = scmp.eq.s32.totalorder %s22, 3
      %p192 = por %p190, %p191
      %p193 = scmp.ne.s32.totalorder %s182, %s183
      %p194 = scmp.eq.s32.totalorder %s22, 0
      %p195 = por %p193, %p194
      %p196 = scmp.ne.s32.totalorder %s182, %s183
      %p197 = scmp.eq.s32.totalorder %s23, 3
      %p198 = por %p196, %p197
      %p200 = scmp.ne.s32.totalorder %s183, %s199
      %p201 = scmp.eq.s32.totalorder %s23, 0
      %p202 = por %p200, %p201
      %p203 = scmp.le.s32.totalorder 1, %s17
      %p204 = scmp.lt.s32.totalorder %s17, 5
      %p205 = pnand %p203, %p204
      %p206 = pneg %p205
      // Predicated region
      $region9: #{nnmod_forward.3} parent=5 // pred_check
        _
      $region10: #{nnmod_forward.3} parent=5 // pred_check_branch
        %208 = sbr.rel (%p205) target = $region12
      $region11: #{nnmod_forward.3} parent=5 // pred_region
        %s209 = ssub.s32 %s17, 1
        // Predicated region
        $region13: #{nnmod_forward.3} parent=11 // pred_check
          %p210 = pneg %p38
        $region14: #{nnmod_forward.3} parent=11 // pred_check_branch
          %212 = sbr.rel (%p210) target = $region16
        $region15: #{nnmod_forward.3} parent=11 // pred_region
          _
        $region16: #{nnmod_forward.3} parent=11 // pred_fallthru
          _
        // Predicated region
        $region17: #{nnmod_forward.3} parent=11 // pred_check
          %p213 = pneg %p85
        $region18: #{nnmod_forward.3} parent=11 // pred_check_branch
          %215 = sbr.rel (%p213) target = $region20
        $region19: #{nnmod_forward.3} parent=11 // pred_region
          _
        $region20: #{nnmod_forward.3} parent=11 // pred_fallthru
          _
        // Predicated region
        $region21: #{nnmod_forward.3} parent=11 // pred_check
          %p216 = pneg %p106
        $region22: #{nnmod_forward.3} parent=11 // pred_check_branch
          %218 = sbr.rel (%p216) target = $region24
        $region23: #{nnmod_forward.3} parent=11 // pred_region
          _
        $region24: #{nnmod_forward.3} parent=11 // pred_fallthru
          _
        // Predicated region
        $region25: #{nnmod_forward.3} parent=11 // pred_check
          %p219 = pneg %p127
        $region26: #{nnmod_forward.3} parent=11 // pred_check_branch
          %221 = sbr.rel (%p219) target = $region28
        $region27: #{nnmod_forward.3} parent=11 // pred_region
          _
        $region28: #{nnmod_forward.3} parent=11 // pred_fallthru
          _
        // Predicated region
        $region29: #{nnmod_forward.3} parent=11 // pred_check
          %p222 = pneg %p148
        $region30: #{nnmod_forward.3} parent=11 // pred_check_branch
          %224 = sbr.rel (%p222) target = $region32
        $region31: #{nnmod_forward.3} parent=11 // pred_region
          _
        $region32: #{nnmod_forward.3} parent=11 // pred_fallthru
          _
        // Predicated region
        $region33: #{nnmod_forward.3} parent=11 // pred_check
          %p225 = pneg %p169
        $region34: #{nnmod_forward.3} parent=11 // pred_check_branch
          %227 = sbr.rel (%p225) target = $region36
        $region35: #{nnmod_forward.3} parent=11 // pred_region
          _
        $region36: #{nnmod_forward.3} parent=11 // pred_fallthru
          _
      $region12: #{nnmod_forward.3} parent=5 // pred_fallthru
        _
      %p228 = scmp.lt.s32.totalorder %s17, 4
      // Predicated region
      $region37: #{nnmod_forward.3} parent=5 // pred_check
        %p229 = pneg %p228
      $region38: #{nnmod_forward.3} parent=5 // pred_check_branch
        %231 = sbr.rel (%p229) target = $region40
      $region39: #{nnmod_forward.3} parent=5 // pred_region
        // Predicated region
        $region41: #{nnmod_forward.3} parent=39 // pred_check
          %p232 = pneg %p58
        $region42: #{nnmod_forward.3} parent=39 // pred_check_branch
          %234 = sbr.rel (%p232) target = $region44
        $region43: #{nnmod_forward.3} parent=39 // pred_region
          %s235 = smul.u32 2, %s17
          %p236 = scmp.lt.s32.totalorder %s235, 7
          %s237 = scalar_select %p236, %s235, 7
          %s238 = smul.addr %s237, 4
          %s239 = scalar_lea.vmem %s1, %s238
          %s240 = smul.u32 2, %s17
        $region44: #{nnmod_forward.3} parent=39 // pred_fallthru
          _
      $region40: #{nnmod_forward.3} parent=5 // pred_fallthru
        _
      %p241 = scmp.le.s32.totalorder 1, %s17
      %p242 = scmp.lt.s32.totalorder %s17, 5
      %p243 = pnand %p241, %p242
      %p244 = pneg %p243
      // Predicated region
      $region45: #{nnmod_forward.3} parent=5 // pred_check
        _
      $region46: #{nnmod_forward.3} parent=5 // pred_check_branch
        %246 = sbr.rel (%p243) target = $region48
      $region47: #{nnmod_forward.3} parent=5 // pred_region
        %s247 = ssub.s32 %s17, 1
        %p248 = pneg %p38
        %p249 = pneg %p35
        %s250 = smul.u32 2, %s22
        %p251 = scmp.lt.s32.totalorder %s250, 7
        %s252 = scalar_select %p251, %s250, 7
        %s253 = smul.addr %s252, 4
        %s254 = scalar_lea.vmem %s1, %s253
        %p255 = pneg %p64
        %p256 = pneg %p61
        %p257 = pneg %p85
        %p258 = pneg %p82
        %p259 = pneg %p106
        %p260 = pneg %p103
        %p261 = pneg %p127
        %p262 = pneg %p124
        %p263 = pneg %p148
        %p264 = pneg %p145
        %p265 = pneg %p169
        %p266 = pneg %p166
        %p267 = pneg %p195
        %p268 = pneg %p192
        %s269 = sand.u32 %s182, 1
        %s270 = scalar_lea.sflag [#allocation4], %s269
        %s271 = sand.u32 %s182, 1
        %s272 = smul.addr %s271, 32
        %s273 = scalar_lea.vmem [#allocation3], %s272
        %s274 = smul.u32 2, %s22
        %p275 = scmp.lt.s32.totalorder %s274, 7
        %s276 = scalar_select %p275, %s274, 7
        %s277 = smul.addr %s276, 4
        %s278 = scalar_lea.vmem %s1, %s277
        %s279 = smul.u32 2, %s22
        %s280 = smul.u32 2, %s22
        %v281 = vlaneseq
        %v282 = vshrl.u32 %v281, 7
        %v283 = vadd.s32 %v282, 8
        %v284 = vadd.s32 %v282, 16
        %v285 = vadd.s32 %v282, 24
        %v286 = vadd.s32 %v282, 32
        %v287 = vadd.s32 %v282, 40
        %v288 = vadd.s32 %v282, 48
        %v289 = vadd.s32 %v282, 56
        %v290 = vld [vmem:[%s278] ss:$4 sm:$0x3]
        %v291 = vperm.slane %v290, 0
        %v292 = vperm.slane %v290, 1
        %vm293 = vcmp.eq.s32.totalorder %v282, %v291
        %vm294 = vcmp.eq.s32.totalorder %v282, %v292
        %vm295 = vcmp.eq.s32.totalorder %v283, %v291
        %vm296 = vcmp.eq.s32.totalorder %v283, %v292
        %vm297 = vcmp.eq.s32.totalorder %v284, %v291
        %vm298 = vcmp.eq.s32.totalorder %v284, %v292
        %vm299 = vcmp.eq.s32.totalorder %v285, %v291
        %vm300 = vcmp.eq.s32.totalorder %v285, %v292
        %vm301 = vcmp.eq.s32.totalorder %v286, %v291
        %vm302 = vcmp.eq.s32.totalorder %v286, %v292
        %vm303 = vcmp.eq.s32.totalorder %v287, %v291
        %vm304 = vcmp.eq.s32.totalorder %v287, %v292
        %vm305 = vcmp.eq.s32.totalorder %v288, %v291
        %vm306 = vcmp.eq.s32.totalorder %v288, %v292
        %vm307 = vcmp.eq.s32.totalorder %v289, %v291
        %vm308 = vcmp.eq.s32.totalorder %v289, %v292
        %v309 = vsel %vm293, 1.0, 0.0
        %v310 = vsel %vm294, 1.0, 0.0
        %v311 = vsel %vm295, 1.0, 0.0
        %v312 = vsel %vm296, 1.0, 0.0
        %v313 = vsel %vm297, 1.0, 0.0
        %v314 = vsel %vm298, 1.0, 0.0
        %v315 = vsel %vm299, 1.0, 0.0
        %v316 = vsel %vm300, 1.0, 0.0
        %v317 = vsel %vm301, 1.0, 0.0
        %v318 = vsel %vm302, 1.0, 0.0
        %v319 = vsel %vm303, 1.0, 0.0
        %v320 = vsel %vm304, 1.0, 0.0
        %v321 = vsel %vm305, 1.0, 0.0
        %v322 = vsel %vm306, 1.0, 0.0
        %v323 = vsel %vm307, 1.0, 0.0
        %v324 = vsel %vm308, 1.0, 0.0
        %s325 = scalar_lea.vmem %s278, 1
        %v326 = vld [vmem:[%s325] ss:$4 sm:$0x3]
        %v327 = vadd.s32 %v326, 16
        %v328 = vperm.slane %v327, 0
        %v329 = vperm.slane %v327, 1
        %vm330 = vcmp.eq.s32.totalorder %v282, %v328
        %vm331 = vcmp.eq.s32.totalorder %v282, %v329
        %vm332 = vcmp.eq.s32.totalorder %v283, %v328
        %vm333 = vcmp.eq.s32.totalorder %v283, %v329
        %vm334 = vcmp.eq.s32.totalorder %v284, %v328
        %vm335 = vcmp.eq.s32.totalorder %v284, %v329
        %vm336 = vcmp.eq.s32.totalorder %v285, %v328
        %vm337 = vcmp.eq.s32.totalorder %v285, %v329
        %vm338 = vcmp.eq.s32.totalorder %v286, %v328
        %vm339 = vcmp.eq.s32.totalorder %v286, %v329
        %vm340 = vcmp.eq.s32.totalorder %v287, %v328
        %vm341 = vcmp.eq.s32.totalorder %v287, %v329
        %vm342 = vcmp.eq.s32.totalorder %v288, %v328
        %vm343 = vcmp.eq.s32.totalorder %v288, %v329
        %vm344 = vcmp.eq.s32.totalorder %v289, %v328
        %vm345 = vcmp.eq.s32.totalorder %v289, %v329
        %v346 = vsel %vm330, 1.0, 0.0
        %v347 = vsel %vm331, 1.0, 0.0
        %v348 = vsel %vm332, 1.0, 0.0
        %v349 = vsel %vm333, 1.0, 0.0
        %v350 = vsel %vm334, 1.0, 0.0
        %v351 = vsel %vm335, 1.0, 0.0
        %v352 = vsel %vm336, 1.0, 0.0
        %v353 = vsel %vm337, 1.0, 0.0
        %v354 = vsel %vm338, 1.0, 0.0
        %v355 = vsel %vm339, 1.0, 0.0
        %v356 = vsel %vm340, 1.0, 0.0
        %v357 = vsel %vm341, 1.0, 0.0
        %v358 = vsel %vm342, 1.0, 0.0
        %v359 = vsel %vm343, 1.0, 0.0
        %v360 = vsel %vm344, 1.0, 0.0
        %v361 = vsel %vm345, 1.0, 0.0
        %v362 = vadd.f32 %v309, %v346
        %v363 = vadd.f32 %v310, %v347
        %v364 = vadd.f32 %v311, %v348
        %v365 = vadd.f32 %v312, %v349
        %v366 = vadd.f32 %v313, %v350
        %v367 = vadd.f32 %v314, %v351
        %v368 = vadd.f32 %v315, %v352
        %v369 = vadd.f32 %v316, %v353
        %v370 = vadd.f32 %v317, %v354
        %v371 = vadd.f32 %v318, %v355
        %v372 = vadd.f32 %v319, %v356
        %v373 = vadd.f32 %v320, %v357
        %v374 = vadd.f32 %v321, %v358
        %v375 = vadd.f32 %v322, %v359
        %v376 = vadd.f32 %v323, %v360
        %v377 = vadd.f32 %v324, %v361
        %s378 = scalar_lea.vmem %s278, 2
        %v379 = vld [vmem:[%s378] ss:$4 sm:$0x3]
        %v380 = vadd.s32 %v379, 32
        %v381 = vperm.slane %v380, 0
        %v382 = vperm.slane %v380, 1
        %vm383 = vcmp.eq.s32.totalorder %v282, %v381
        %vm384 = vcmp.eq.s32.totalorder %v282, %v382
        %vm385 = vcmp.eq.s32.totalorder %v283, %v381
        %vm386 = vcmp.eq.s32.totalorder %v283, %v382
        %vm387 = vcmp.eq.s32.totalorder %v284, %v381
        %vm388 = vcmp.eq.s32.totalorder %v284, %v382
        %vm389 = vcmp.eq.s32.totalorder %v285, %v381
        %vm390 = vcmp.eq.s32.totalorder %v285, %v382
        %vm391 = vcmp.eq.s32.totalorder %v286, %v381
        %vm392 = vcmp.eq.s32.totalorder %v286, %v382
        %vm393 = vcmp.eq.s32.totalorder %v287, %v381
        %vm394 = vcmp.eq.s32.totalorder %v287, %v382
        %vm395 = vcmp.eq.s32.totalorder %v288, %v381
        %vm396 = vcmp.eq.s32.totalorder %v288, %v382
        %vm397 = vcmp.eq.s32.totalorder %v289, %v381
        %vm398 = vcmp.eq.s32.totalorder %v289, %v382
        %v399 = vsel %vm383, 1.0, 0.0
        %v400 = vsel %vm384, 1.0, 0.0
        %v401 = vsel %vm385, 1.0, 0.0
        %v402 = vsel %vm386, 1.0, 0.0
        %v403 = vsel %vm387, 1.0, 0.0
        %v404 = vsel %vm388, 1.0, 0.0
        %v405 = vsel %vm389, 1.0, 0.0
        %v406 = vsel %vm390, 1.0, 0.0
        %v407 = vsel %vm391, 1.0, 0.0
        %v408 = vsel %vm392, 1.0, 0.0
        %v409 = vsel %vm393, 1.0, 0.0
        %v410 = vsel %vm394, 1.0, 0.0
        %v411 = vsel %vm395, 1.0, 0.0
        %v412 = vsel %vm396, 1.0, 0.0
        %v413 = vsel %vm397, 1.0, 0.0
        %v414 = vsel %vm398, 1.0, 0.0
        %v415 = vadd.f32 %v362, %v399
        %v416 = vadd.f32 %v363, %v400
        %v417 = vadd.f32 %v364, %v401
        %v418 = vadd.f32 %v365, %v402
        %v419 = vadd.f32 %v366, %v403
        %v420 = vadd.f32 %v367, %v404
        %v421 = vadd.f32 %v368, %v405
        %v422 = vadd.f32 %v369, %v406
        %v423 = vadd.f32 %v370, %v407
        %v424 = vadd.f32 %v371, %v408
        %v425 = vadd.f32 %v372, %v409
        %v426 = vadd.f32 %v373, %v410
        %v427 = vadd.f32 %v374, %v411
        %v428 = vadd.f32 %v375, %v412
        %v429 = vadd.f32 %v376, %v413
        %v430 = vadd.f32 %v377, %v414
        %s431 = scalar_lea.vmem %s278, 3
        %v432 = vld [vmem:[%s431] ss:$4 sm:$0x3]
        %v433 = vadd.s32 %v432, 48
        %v434 = vperm.slane %v433, 0
        %v435 = vperm.slane %v433, 1
        %vm436 = vcmp.eq.s32.totalorder %v282, %v434
        %vm437 = vcmp.eq.s32.totalorder %v282, %v435
        %vm438 = vcmp.eq.s32.totalorder %v283, %v434
        %vm439 = vcmp.eq.s32.totalorder %v283, %v435
        %vm440 = vcmp.eq.s32.totalorder %v284, %v434
        %vm441 = vcmp.eq.s32.totalorder %v284, %v435
        %vm442 = vcmp.eq.s32.totalorder %v285, %v434
        %vm443 = vcmp.eq.s32.totalorder %v285, %v435
        %vm444 = vcmp.eq.s32.totalorder %v286, %v434
        %vm445 = vcmp.eq.s32.totalorder %v286, %v435
        %vm446 = vcmp.eq.s32.totalorder %v287, %v434
        %vm447 = vcmp.eq.s32.totalorder %v287, %v435
        %vm448 = vcmp.eq.s32.totalorder %v288, %v434
        %vm449 = vcmp.eq.s32.totalorder %v288, %v435
        %vm450 = vcmp.eq.s32.totalorder %v289, %v434
        %vm451 = vcmp.eq.s32.totalorder %v289, %v435
        %v452 = vsel %vm436, 1.0, 0.0
        %v453 = vsel %vm437, 1.0, 0.0
        %v454 = vsel %vm438, 1.0, 0.0
        %v455 = vsel %vm439, 1.0, 0.0
        %v456 = vsel %vm440, 1.0, 0.0
        %v457 = vsel %vm441, 1.0, 0.0
        %v458 = vsel %vm442, 1.0, 0.0
        %v459 = vsel %vm443, 1.0, 0.0
        %v460 = vsel %vm444, 1.0, 0.0
        %v461 = vsel %vm445, 1.0, 0.0
        %v462 = vsel %vm446, 1.0, 0.0
        %v463 = vsel %vm447, 1.0, 0.0
        %v464 = vsel %vm448, 1.0, 0.0
        %v465 = vsel %vm449, 1.0, 0.0
        %v466 = vsel %vm450, 1.0, 0.0
        %v467 = vsel %vm451, 1.0, 0.0
        %v468 = vadd.f32 %v415, %v452
        %v469 = vadd.f32 %v416, %v453
        %v470 = vadd.f32 %v417, %v454
        %v471 = vadd.f32 %v418, %v455
        %v472 = vadd.f32 %v419, %v456
        %v473 = vadd.f32 %v420, %v457
        %v474 = vadd.f32 %v421, %v458
        %v475 = vadd.f32 %v422, %v459
        %v476 = vadd.f32 %v423, %v460
        %v477 = vadd.f32 %v424, %v461
        %v478 = vadd.f32 %v425, %v462
        %v479 = vadd.f32 %v426, %v463
        %v480 = vadd.f32 %v427, %v464
        %v481 = vadd.f32 %v428, %v465
        %v482 = vadd.f32 %v429, %v466
        %v483 = vadd.f32 %v430, %v467
        %v484 = vld [vmem:[%s2] sm:$0xff]
        %v485 = vld [vmem:[%s2 + $0x8] sm:$0xff]
        %v486 = vld [vmem:[%s2 + $0x10] sm:$0xff]
        %v487 = vld [vmem:[%s2 + $0x18] sm:$0xff]
        %v488 = vld [vmem:[%s2 + $0x20] sm:$0xff]
        %v489 = vld [vmem:[%s2 + $0x28] sm:$0xff]
        %v490 = vld [vmem:[%s2 + $0x30] sm:$0xff]
        %v491 = vld [vmem:[%s2 + $0x38] sm:$0xff]
        %v492 = vld [vmem:[%s2 + $0x40] sm:$0xff]
        %v493 = vld [vmem:[%s2 + $0x48] sm:$0xff]
        %v494 = vld [vmem:[%s2 + $0x50] sm:$0xff]
        %v495 = vld [vmem:[%s2 + $0x58] sm:$0xff]
        %v496 = vld [vmem:[%s2 + $0x60] sm:$0xff]
        %v497 = vld [vmem:[%s2 + $0x68] sm:$0xff]
        %v498 = vld [vmem:[%s2 + $0x70] sm:$0xff]
        %v499 = vld [vmem:[%s2 + $0x78] sm:$0xff]
        %vm500 = vcmask 523264
        %v502 = vsel %vm500, %v484, 0
        %v505 = vsel %vm500, %v485, 0
        %v508 = vsel %vm500, %v486, 0
        %v511 = vsel %vm500, %v487, 0
        %v514 = vsel %vm500, %v488, 0
        %v517 = vsel %vm500, %v489, 0
        %v520 = vsel %vm500, %v490, 0
        %v523 = vsel %vm500, %v491, 0
        %v526 = vsel %vm500, %v492, 0
        %v529 = vsel %vm500, %v493, 0
        %v532 = vsel %vm500, %v494, 0
        %v535 = vsel %vm500, %v495, 0
        %v538 = vsel %vm500, %v496, 0
        %v541 = vsel %vm500, %v497, 0
        %v544 = vsel %vm500, %v498, 0
        %v547 = vsel %vm500, %v499, 0
        %549 = vmatpush.msra.mxu0 0.0
        %550 = vmatpush.msra.mxu0 0.0
        %551 = vmatpush.msra.mxu0 0.0
        %552 = vmatpush.msra.mxu0 0.0
        %553 = vmatpush.msra.mxu0 0.0
        %554 = vmatpush.msra.mxu0 0.0
        %555 = vmatpush.msra.mxu0 0.0
        %556 = vmatpush.msra.mxu0 0.0
        %557 = vmatpush.msra.mxu0 %v482
        %558 = vmatpush.msra.mxu0 %v480
        %559 = vmatpush.msra.mxu0 %v478
        %560 = vmatpush.msra.mxu0 %v476
        %561 = vmatpush.msra.mxu0 %v474
        %562 = vmatpush.msra.mxu0 %v472
        %563 = vmatpush.msra.mxu0 %v470
        %564 = vmatpush.msra.mxu0 %v468
        %565 = vmatmul.f32.gmra.mxu0 %v502
        %v566 = vpop.f32.mrf.mxu0
        %v567 = vadd.f32 0.0, %v566
        %568 = vmatmul.f32.gmra.mxu0 %v505
        %v569 = vpop.f32.mrf.mxu0
        %v570 = vadd.f32 0.0, %v569
        %571 = vmatmul.f32.gmra.mxu0 %v508
        %v572 = vpop.f32.mrf.mxu0
        %v573 = vadd.f32 0.0, %v572
        %574 = vmatmul.f32.gmra.mxu0 %v511
        %v575 = vpop.f32.mrf.mxu0
        %v576 = vadd.f32 0.0, %v575
        %577 = vmatmul.f32.gmra.mxu0 %v514
        %v578 = vpop.f32.mrf.mxu0
        %v579 = vadd.f32 0.0, %v578
        %580 = vmatmul.f32.gmra.mxu0 %v517
        %v581 = vpop.f32.mrf.mxu0
        %v582 = vadd.f32 0.0, %v581
        %583 = vmatmul.f32.gmra.mxu0 %v520
        %v584 = vpop.f32.mrf.mxu0
        %v585 = vadd.f32 0.0, %v584
        %586 = vmatmul.f32.gmra.mxu0 %v523
        %v587 = vpop.f32.mrf.mxu0
        %v588 = vadd.f32 0.0, %v587
        %589 = vmatmul.f32.gmra.mxu0 %v526
        %v590 = vpop.f32.mrf.mxu0
        %v591 = vadd.f32 0.0, %v590
        %592 = vmatmul.f32.gmra.mxu0 %v529
        %v593 = vpop.f32.mrf.mxu0
        %v594 = vadd.f32 0.0, %v593
        %595 = vmatmul.f32.gmra.mxu0 %v532
        %v596 = vpop.f32.mrf.mxu0
        %v597 = vadd.f32 0.0, %v596
        %598 = vmatmul.f32.gmra.mxu0 %v535
        %v599 = vpop.f32.mrf.mxu0
        %v600 = vadd.f32 0.0, %v599
        %601 = vmatmul.f32.gmra.mxu0 %v538
        %v602 = vpop.f32.mrf.mxu0
        %v603 = vadd.f32 0.0, %v602
        %604 = vmatmul.f32.gmra.mxu0 %v541
        %v605 = vpop.f32.mrf.mxu0
        %v606 = vadd.f32 0.0, %v605
        %607 = vmatmul.f32.gmra.mxu0 %v544
        %v608 = vpop.f32.mrf.mxu0
        %v609 = vadd.f32 0.0, %v608
        %610 = vmatmul.f32.gmra.mxu0 %v547
        %v611 = vpop.f32.mrf.mxu0
        %v612 = vadd.f32 0.0, %v611
        %613 = vdwg.mxu0
        %614 = vmatpush.msra.mxu0 0.0
        %615 = vmatpush.msra.mxu0 0.0
        %616 = vmatpush.msra.mxu0 0.0
        %617 = vmatpush.msra.mxu0 0.0
        %618 = vmatpush.msra.mxu0 0.0
        %619 = vmatpush.msra.mxu0 0.0
        %620 = vmatpush.msra.mxu0 0.0
        %621 = vmatpush.msra.mxu0 0.0
        %622 = vmatpush.msra.mxu0 %v483
        %623 = vmatpush.msra.mxu0 %v481
        %624 = vmatpush.msra.mxu0 %v479
        %625 = vmatpush.msra.mxu0 %v477
        %626 = vmatpush.msra.mxu0 %v475
        %627 = vmatpush.msra.mxu0 %v473
        %628 = vmatpush.msra.mxu0 %v471
        %629 = vmatpush.msra.mxu0 %v469
        %630 = vmatmul.f32.gmra.mxu0 %v502
        %v631 = vpop.f32.mrf.mxu0
        %v632 = vadd.f32 0.0, %v631
        %633 = vmatmul.f32.gmra.mxu0 %v505
        %v634 = vpop.f32.mrf.mxu0
        %v635 = vadd.f32 0.0, %v634
        %636 = vmatmul.f32.gmra.mxu0 %v508
        %v637 = vpop.f32.mrf.mxu0
        %v638 = vadd.f32 0.0, %v637
        %639 = vmatmul.f32.gmra.mxu0 %v511
        %v640 = vpop.f32.mrf.mxu0
        %v641 = vadd.f32 0.0, %v640
        %642 = vmatmul.f32.gmra.mxu0 %v514
        %v643 = vpop.f32.mrf.mxu0
        %v644 = vadd.f32 0.0, %v643
        %645 = vmatmul.f32.gmra.mxu0 %v517
        %v646 = vpop.f32.mrf.mxu0
        %v647 = vadd.f32 0.0, %v646
        %648 = vmatmul.f32.gmra.mxu0 %v520
        %v649 = vpop.f32.mrf.mxu0
        %v650 = vadd.f32 0.0, %v649
        %651 = vmatmul.f32.gmra.mxu0 %v523
        %v652 = vpop.f32.mrf.mxu0
        %v653 = vadd.f32 0.0, %v652
        %654 = vmatmul.f32.gmra.mxu0 %v526
        %v655 = vpop.f32.mrf.mxu0
        %v656 = vadd.f32 0.0, %v655
        %657 = vmatmul.f32.gmra.mxu0 %v529
        %v658 = vpop.f32.mrf.mxu0
        %v659 = vadd.f32 0.0, %v658
        %660 = vmatmul.f32.gmra.mxu0 %v532
        %v661 = vpop.f32.mrf.mxu0
        %v662 = vadd.f32 0.0, %v661
        %663 = vmatmul.f32.gmra.mxu0 %v535
        %v664 = vpop.f32.mrf.mxu0
        %v665 = vadd.f32 0.0, %v664
        %666 = vmatmul.f32.gmra.mxu0 %v538
        %v667 = vpop.f32.mrf.mxu0
        %v668 = vadd.f32 0.0, %v667
        %669 = vmatmul.f32.gmra.mxu0 %v541
        %v670 = vpop.f32.mrf.mxu0
        %v671 = vadd.f32 0.0, %v670
        %672 = vmatmul.f32.gmra.mxu0 %v544
        %v673 = vpop.f32.mrf.mxu0
        %v674 = vadd.f32 0.0, %v673
        %675 = vmatmul.f32.gmra.mxu0 %v547
        %v676 = vpop.f32.mrf.mxu0
        %v677 = vadd.f32 0.0, %v676
        %678 = vdwg.mxu0
        %v679 = vmax.f32 %v567, 0.0
        %v680 = vmax.f32 %v632, 0.0
        %v681 = vmax.f32 %v570, 0.0
        %v682 = vmax.f32 %v635, 0.0
        %v683 = vmax.f32 %v573, 0.0
        %v684 = vmax.f32 %v638, 0.0
        %v685 = vmax.f32 %v576, 0.0
        %v686 = vmax.f32 %v641, 0.0
        %v687 = vmax.f32 %v579, 0.0
        %v688 = vmax.f32 %v644, 0.0
        %v689 = vmax.f32 %v582, 0.0
        %v690 = vmax.f32 %v647, 0.0
        %v691 = vmax.f32 %v585, 0.0
        %v692 = vmax.f32 %v650, 0.0
        %v693 = vmax.f32 %v588, 0.0
        %v694 = vmax.f32 %v653, 0.0
        %v695 = vmax.f32 %v591, 0.0
        %v696 = vmax.f32 %v656, 0.0
        %v697 = vmax.f32 %v594, 0.0
        %v698 = vmax.f32 %v659, 0.0
        %v699 = vmax.f32 %v597, 0.0
        %v700 = vmax.f32 %v662, 0.0
        %v701 = vmax.f32 %v600, 0.0
        %v702 = vmax.f32 %v665, 0.0
        %v703 = vmax.f32 %v603, 0.0
        %v704 = vmax.f32 %v668, 0.0
        %v705 = vmax.f32 %v606, 0.0
        %v706 = vmax.f32 %v671, 0.0
        %v707 = vmax.f32 %v609, 0.0
        %v708 = vmax.f32 %v674, 0.0
        %v709 = vmax.f32 %v612, 0.0
        %v710 = vmax.f32 %v677, 0.0
        %v711 = vld [vmem:[%s3] sm:$0xff]
        %v712 = vld [vmem:[%s3 + $0x8] sm:$0xff]
        %v713 = vld [vmem:[%s3 + $0x10] sm:$0xff]
        %v714 = vld [vmem:[%s3 + $0x18] sm:$0xff]
        %v715 = vld [vmem:[%s3 + $0x20] sm:$0xff]
        %v716 = vld [vmem:[%s3 + $0x28] sm:$0xff]
        %v717 = vld [vmem:[%s3 + $0x30] sm:$0xff]
        %v718 = vld [vmem:[%s3 + $0x38] sm:$0xff]
        %v719 = vld [vmem:[%s3 + $0x40] sm:$0xff]
        %v720 = vld [vmem:[%s3 + $0x48] sm:$0xff]
        %v721 = vld [vmem:[%s3 + $0x50] sm:$0xff]
        %v722 = vld [vmem:[%s3 + $0x58] sm:$0xff]
        %v723 = vld [vmem:[%s3 + $0x60] sm:$0xff]
        %v724 = vld [vmem:[%s3 + $0x68] sm:$0xff]
        %v725 = vld [vmem:[%s3 + $0x70] sm:$0xff]
        %v726 = vld [vmem:[%s3 + $0x78] sm:$0xff]
        %v727 = vld [vmem:[%s4] sm:$0xff]
        %v728 = vld [vmem:[%s4 + $0x8] sm:$0xff]
        %v729 = vld [vmem:[%s4 + $0x10] sm:$0xff]
        %v730 = vld [vmem:[%s4 + $0x18] sm:$0xff]
        %v731 = vld [vmem:[%s4 + $0x20] sm:$0xff]
        %v732 = vld [vmem:[%s4 + $0x28] sm:$0xff]
        %v733 = vld [vmem:[%s4 + $0x30] sm:$0xff]
        %v734 = vld [vmem:[%s4 + $0x38] sm:$0xff]
        %v735 = vld [vmem:[%s4 + $0x40] sm:$0xff]
        %v736 = vld [vmem:[%s4 + $0x48] sm:$0xff]
        %v737 = vld [vmem:[%s4 + $0x50] sm:$0xff]
        %v738 = vld [vmem:[%s4 + $0x58] sm:$0xff]
        %v739 = vld [vmem:[%s4 + $0x60] sm:$0xff]
        %v740 = vld [vmem:[%s4 + $0x68] sm:$0xff]
        %v741 = vld [vmem:[%s4 + $0x70] sm:$0xff]
        %v742 = vld [vmem:[%s4 + $0x78] sm:$0xff]
        %744 = vset.pattern.permute.xlu0 0
        %745 = vperm.xlu0 %744, %v727
        %v746 = vpop.permute.xlu0 %745
        %749 = vset.pattern.permute.xlu0 0
        %750 = vperm.xlu0 %749, %v728
        %v751 = vpop.permute.xlu0 %750
        %754 = vset.pattern.permute.xlu0 0
        %755 = vperm.xlu0 %754, %v729
        %v756 = vpop.permute.xlu0 %755
        %759 = vset.pattern.permute.xlu0 0
        %760 = vperm.xlu0 %759, %v730
        %v761 = vpop.permute.xlu0 %760
        %764 = vset.pattern.permute.xlu0 0
        %765 = vperm.xlu0 %764, %v731
        %v766 = vpop.permute.xlu0 %765
        %769 = vset.pattern.permute.xlu0 0
        %770 = vperm.xlu0 %769, %v732
        %v771 = vpop.permute.xlu0 %770
        %774 = vset.pattern.permute.xlu0 0
        %775 = vperm.xlu0 %774, %v733
        %v776 = vpop.permute.xlu0 %775
        %779 = vset.pattern.permute.xlu0 0
        %780 = vperm.xlu0 %779, %v734
        %v781 = vpop.permute.xlu0 %780
        %784 = vset.pattern.permute.xlu0 0
        %785 = vperm.xlu0 %784, %v735
        %v786 = vpop.permute.xlu0 %785
        %789 = vset.pattern.permute.xlu0 0
        %790 = vperm.xlu0 %789, %v736
        %v791 = vpop.permute.xlu0 %790
        %794 = vset.pattern.permute.xlu0 0
        %795 = vperm.xlu0 %794, %v737
        %v796 = vpop.permute.xlu0 %795
        %799 = vset.pattern.permute.xlu0 0
        %800 = vperm.xlu0 %799, %v738
        %v801 = vpop.permute.xlu0 %800
        %804 = vset.pattern.permute.xlu0 0
        %805 = vperm.xlu0 %804, %v739
        %v806 = vpop.permute.xlu0 %805
        %809 = vset.pattern.permute.xlu0 0
        %810 = vperm.xlu0 %809, %v740
        %v811 = vpop.permute.xlu0 %810
        %814 = vset.pattern.permute.xlu0 0
        %815 = vperm.xlu0 %814, %v741
        %v816 = vpop.permute.xlu0 %815
        %819 = vset.pattern.permute.xlu0 0
        %820 = vperm.xlu0 %819, %v742
        %v821 = vpop.permute.xlu0 %820
        %823 = vmatpush.msra.mxu0 %v709
        %824 = vmatpush.msra.mxu0 %v707
        %825 = vmatpush.msra.mxu0 %v705
        %826 = vmatpush.msra.mxu0 %v703
        %827 = vmatpush.msra.mxu0 %v701
        %828 = vmatpush.msra.mxu0 %v699
        %829 = vmatpush.msra.mxu0 %v697
        %830 = vmatpush.msra.mxu0 %v695
        %831 = vmatpush.msra.mxu0 %v693
        %832 = vmatpush.msra.mxu0 %v691
        %833 = vmatpush.msra.mxu0 %v689
        %834 = vmatpush.msra.mxu0 %v687
        %835 = vmatpush.msra.mxu0 %v685
        %836 = vmatpush.msra.mxu0 %v683
        %837 = vmatpush.msra.mxu0 %v681
        %838 = vmatpush.msra.mxu0 %v679
        %839 = vmatmul.f32.gmra.mxu0 %v711
        %v840 = vpop.f32.mrf.mxu0
        %v841 = vadd.f32 %v746, %v840
        %842 = vmatmul.f32.gmra.mxu0 %v712
        %v843 = vpop.f32.mrf.mxu0
        %v844 = vadd.f32 %v751, %v843
        %845 = vmatmul.f32.gmra.mxu0 %v713
        %v846 = vpop.f32.mrf.mxu0
        %v847 = vadd.f32 %v756, %v846
        %848 = vmatmul.f32.gmra.mxu0 %v714
        %v849 = vpop.f32.mrf.mxu0
        %v850 = vadd.f32 %v761, %v849
        %851 = vmatmul.f32.gmra.mxu0 %v715
        %v852 = vpop.f32.mrf.mxu0
        %v853 = vadd.f32 %v766, %v852
        %854 = vmatmul.f32.gmra.mxu0 %v716
        %v855 = vpop.f32.mrf.mxu0
        %v856 = vadd.f32 %v771, %v855
        %857 = vmatmul.f32.gmra.mxu0 %v717
        %v858 = vpop.f32.mrf.mxu0
        %v859 = vadd.f32 %v776, %v858
        %860 = vmatmul.f32.gmra.mxu0 %v718
        %v861 = vpop.f32.mrf.mxu0
        %v862 = vadd.f32 %v781, %v861
        %863 = vmatmul.f32.gmra.mxu0 %v719
        %v864 = vpop.f32.mrf.mxu0
        %v865 = vadd.f32 %v786, %v864
        %866 = vmatmul.f32.gmra.mxu0 %v720
        %v867 = vpop.f32.mrf.mxu0
        %v868 = vadd.f32 %v791, %v867
        %869 = vmatmul.f32.gmra.mxu0 %v721
        %v870 = vpop.f32.mrf.mxu0
        %v871 = vadd.f32 %v796, %v870
        %872 = vmatmul.f32.gmra.mxu0 %v722
        %v873 = vpop.f32.mrf.mxu0
        %v874 = vadd.f32 %v801, %v873
        %875 = vmatmul.f32.gmra.mxu0 %v723
        %v876 = vpop.f32.mrf.mxu0
        %v877 = vadd.f32 %v806, %v876
        %878 = vmatmul.f32.gmra.mxu0 %v724
        %v879 = vpop.f32.mrf.mxu0
        %v880 = vadd.f32 %v811, %v879
        %881 = vmatmul.f32.gmra.mxu0 %v725
        %v882 = vpop.f32.mrf.mxu0
        %v883 = vadd.f32 %v816, %v882
        %884 = vmatmul.f32.gmra.mxu0 %v726
        %v885 = vpop.f32.mrf.mxu0
        %v886 = vadd.f32 %v821, %v885
        %887 = vdwg.mxu0
        %888 = vmatpush.msra.mxu0 %v710
        %889 = vmatpush.msra.mxu0 %v708
        %890 = vmatpush.msra.mxu0 %v706
        %891 = vmatpush.msra.mxu0 %v704
        %892 = vmatpush.msra.mxu0 %v702
        %893 = vmatpush.msra.mxu0 %v700
        %894 = vmatpush.msra.mxu0 %v698
        %895 = vmatpush.msra.mxu0 %v696
        %896 = vmatpush.msra.mxu0 %v694
        %897 = vmatpush.msra.mxu0 %v692
        %898 = vmatpush.msra.mxu0 %v690
        %899 = vmatpush.msra.mxu0 %v688
        %900 = vmatpush.msra.mxu0 %v686
        %901 = vmatpush.msra.mxu0 %v684
        %902 = vmatpush.msra.mxu0 %v682
        %903 = vmatpush.msra.mxu0 %v680
        %904 = vmatmul.f32.gmra.mxu0 %v711
        %v905 = vpop.f32.mrf.mxu0
        %v906 = vadd.f32 %v746, %v905
        %907 = vmatmul.f32.gmra.mxu0 %v712
        %v908 = vpop.f32.mrf.mxu0
        %v909 = vadd.f32 %v751, %v908
        %910 = vmatmul.f32.gmra.mxu0 %v713
        %v911 = vpop.f32.mrf.mxu0
        %v912 = vadd.f32 %v756, %v911
        %913 = vmatmul.f32.gmra.mxu0 %v714
        %v914 = vpop.f32.mrf.mxu0
        %v915 = vadd.f32 %v761, %v914
        %916 = vmatmul.f32.gmra.mxu0 %v715
        %v917 = vpop.f32.mrf.mxu0
        %v918 = vadd.f32 %v766, %v917
        %919 = vmatmul.f32.gmra.mxu0 %v716
        %v920 = vpop.f32.mrf.mxu0
        %v921 = vadd.f32 %v771, %v920
        %922 = vmatmul.f32.gmra.mxu0 %v717
        %v923 = vpop.f32.mrf.mxu0
        %v924 = vadd.f32 %v776, %v923
        %925 = vmatmul.f32.gmra.mxu0 %v718
        %v926 = vpop.f32.mrf.mxu0
        %v927 = vadd.f32 %v781, %v926
        %928 = vmatmul.f32.gmra.mxu0 %v719
        %v929 = vpop.f32.mrf.mxu0
        %v930 = vadd.f32 %v786, %v929
        %931 = vmatmul.f32.gmra.mxu0 %v720
        %v932 = vpop.f32.mrf.mxu0
        %v933 = vadd.f32 %v791, %v932
        %934 = vmatmul.f32.gmra.mxu0 %v721
        %v935 = vpop.f32.mrf.mxu0
        %v936 = vadd.f32 %v796, %v935
        %937 = vmatmul.f32.gmra.mxu0 %v722
        %v938 = vpop.f32.mrf.mxu0
        %v939 = vadd.f32 %v801, %v938
        %940 = vmatmul.f32.gmra.mxu0 %v723
        %v941 = vpop.f32.mrf.mxu0
        %v942 = vadd.f32 %v806, %v941
        %943 = vmatmul.f32.gmra.mxu0 %v724
        %v944 = vpop.f32.mrf.mxu0
        %v945 = vadd.f32 %v811, %v944
        %946 = vmatmul.f32.gmra.mxu0 %v725
        %v947 = vpop.f32.mrf.mxu0
        %v948 = vadd.f32 %v816, %v947
        %949 = vmatmul.f32.gmra.mxu0 %v726
        %v950 = vpop.f32.mrf.mxu0
        %v951 = vadd.f32 %v821, %v950
        %952 = vdwg.mxu0
        %v953 = vmax.f32 %v841, 0.0
        %v954 = vmax.f32 %v906, 0.0
        %v955 = vmax.f32 %v844, 0.0
        %v956 = vmax.f32 %v909, 0.0
        %v957 = vmax.f32 %v847, 0.0
        %v958 = vmax.f32 %v912, 0.0
        %v959 = vmax.f32 %v850, 0.0
        %v960 = vmax.f32 %v915, 0.0
        %v961 = vmax.f32 %v853, 0.0
        %v962 = vmax.f32 %v918, 0.0
        %v963 = vmax.f32 %v856, 0.0
        %v964 = vmax.f32 %v921, 0.0
        %v965 = vmax.f32 %v859, 0.0
        %v966 = vmax.f32 %v924, 0.0
        %v967 = vmax.f32 %v862, 0.0
        %v968 = vmax.f32 %v927, 0.0
        %v969 = vmax.f32 %v865, 0.0
        %v970 = vmax.f32 %v930, 0.0
        %v971 = vmax.f32 %v868, 0.0
        %v972 = vmax.f32 %v933, 0.0
        %v973 = vmax.f32 %v871, 0.0
        %v974 = vmax.f32 %v936, 0.0
        %v975 = vmax.f32 %v874, 0.0
        %v976 = vmax.f32 %v939, 0.0
        %v977 = vmax.f32 %v877, 0.0
        %v978 = vmax.f32 %v942, 0.0
        %v979 = vmax.f32 %v880, 0.0
        %v980 = vmax.f32 %v945, 0.0
        %v981 = vmax.f32 %v883, 0.0
        %v982 = vmax.f32 %v948, 0.0
        %v983 = vmax.f32 %v886, 0.0
        %v984 = vmax.f32 %v951, 0.0
        %s985 = sld [smem:[#allocation2]]
        %v986 = vld [vmem:[%s5] sm:$0xff]
        %v987 = vld [vmem:[%s5 + $0x8] sm:$0xff]
        %v988 = vstv %s985
        %v989 = vmul.f32 %v986, %v988
        %v990 = vmul.f32 %v987, %v988
        %v991 = vld [vmem:[%s6] sm:$0xff]
        %v992 = vld [vmem:[%s6 + $0x8] sm:$0xff]
        %v993 = vmul.f32 %v991, %v988
        %v994 = vmul.f32 %v992, %v988
        %996 = vset.pattern.permute.xlu0 0
        %997 = vperm.xlu0 %996, %v993
        %v998 = vpop.permute.xlu0 %997
        %1001 = vset.pattern.permute.xlu0 0
        %1002 = vperm.xlu0 %1001, %v994
        %v1003 = vpop.permute.xlu0 %1002
        %1005 = vmatpush.msra.mxu0 %v983
        %1006 = vmatpush.msra.mxu0 %v981
        %1007 = vmatpush.msra.mxu0 %v979
        %1008 = vmatpush.msra.mxu0 %v977
        %1009 = vmatpush.msra.mxu0 %v975
        %1010 = vmatpush.msra.mxu0 %v973
        %1011 = vmatpush.msra.mxu0 %v971
        %1012 = vmatpush.msra.mxu0 %v969
        %1013 = vmatpush.msra.mxu0 %v967
        %1014 = vmatpush.msra.mxu0 %v965
        %1015 = vmatpush.msra.mxu0 %v963
        %1016 = vmatpush.msra.mxu0 %v961
        %1017 = vmatpush.msra.mxu0 %v959
        %1018 = vmatpush.msra.mxu0 %v957
        %1019 = vmatpush.msra.mxu0 %v955
        %1020 = vmatpush.msra.mxu0 %v953
        %1021 = vmatmul.f32.gmra.mxu0 %v989
        %v1022 = vpop.f32.mrf.mxu0
        %v1023 = vadd.f32 %v998, %v1022
        %1024 = vmatmul.f32.gmra.mxu0 %v990
        %v1025 = vpop.f32.mrf.mxu0
        %v1026 = vadd.f32 %v1003, %v1025
        %1027 = vdwg.mxu0
        %1028 = vmatpush.msra.mxu0 %v984
        %1029 = vmatpush.msra.mxu0 %v982
        %1030 = vmatpush.msra.mxu0 %v980
        %1031 = vmatpush.msra.mxu0 %v978
        %1032 = vmatpush.msra.mxu0 %v976
        %1033 = vmatpush.msra.mxu0 %v974
        %1034 = vmatpush.msra.mxu0 %v972
        %1035 = vmatpush.msra.mxu0 %v970
        %1036 = vmatpush.msra.mxu0 %v968
        %1037 = vmatpush.msra.mxu0 %v966
        %1038 = vmatpush.msra.mxu0 %v964
        %1039 = vmatpush.msra.mxu0 %v962
        %1040 = vmatpush.msra.mxu0 %v960
        %1041 = vmatpush.msra.mxu0 %v958
        %1042 = vmatpush.msra.mxu0 %v956
        %1043 = vmatpush.msra.mxu0 %v954
        %1044 = vmatmul.f32.gmra.mxu0 %v989
        %v1045 = vpop.f32.mrf.mxu0
        %v1046 = vadd.f32 %v998, %v1045
        %1047 = vmatmul.f32.gmra.mxu0 %v990
        %v1048 = vpop.f32.mrf.mxu0
        %v1049 = vadd.f32 %v1003, %v1048
        %1050 = vdwg.mxu0
        %1051 = vst [vmem:[%s273] sm:$0xff] %v1023
        %1052 = vst [vmem:[%s273 + $0x8] sm:$0xff] %v1046
        %1053 = vst [vmem:[%s273 + $0x10] sm:$0xff] %v1026
        %1054 = vst [vmem:[%s273 + $0x18] sm:$0xff] %v1049
        %s1055 = sand.u32 %s182, 1
        %s1056 = scalar_lea.sflag [#allocation4], %s1055
        %s1057 = sand.u32 %s182, 1
        %s1058 = smul.addr %s1057, 32
        %s1059 = scalar_lea.vmem [#allocation3], %s1058
        // Predicated region
        $region49: #{nnmod_forward.3} parent=47 // pred_check
          %p1060 = pneg %p192
        $region50: #{nnmod_forward.3} parent=47 // pred_check_branch
          %1062 = sbr.rel (%p1060) target = $region52
        $region51: #{nnmod_forward.3} parent=47 // pred_region
          %s1063 = smul.u32 2, %s22
          %1065 = vsyncadd %s1056, 0
          %s1066 = smul.addr %s1063, 8
          %s1067 = scalar_lea.hbm %s7, %s1066
          %s1068 = sshll.u32 %s1059, 4
          %s1069 = int_to_ptr.vmem [resolvable:$true] %s1068
          %s1070 = sshll.u32 %s1067, 4
          %s1071 = int_to_ptr.hbm [resolvable:$true] %s1070
          %1076 = dma.vmem_to_hbm [thread:$0]  %s1069, 512, %s1071, %s1056, 256, 1024, 16
        $region52: #{nnmod_forward.3} parent=47 // pred_fallthru
          _
      $region48: #{nnmod_forward.3} parent=5 // pred_fallthru
        _
      %p1077 = scmp.le.s32.totalorder 2, %s17
      // Predicated region
      $region53: #{nnmod_forward.3} parent=5 // pred_check
        %p1078 = pneg %p1077
      $region54: #{nnmod_forward.3} parent=5 // pred_check_branch
        %1080 = sbr.rel (%p1078) target = $region56
      $region55: #{nnmod_forward.3} parent=5 // pred_region
        %s1081 = ssub.s32 %s17, 2
        // Predicated region
        $region57: #{nnmod_forward.3} parent=55 // pred_check
          %p1082 = pneg %p198
        $region58: #{nnmod_forward.3} parent=55 // pred_check_branch
          %1084 = sbr.rel (%p1082) target = $region60
        $region59: #{nnmod_forward.3} parent=55 // pred_region
          %s1085 = sand.u32 %s183, 1
          %s1086 = scalar_lea.sflag [#allocation4], %s1085
          %s1087 = sand.u32 %s183, 1
          %s1088 = smul.addr %s1087, 32
          %s1089 = scalar_lea.vmem [#allocation3], %s1088
          %1091 = dma.done %s1086, 512
        $region60: #{nnmod_forward.3} parent=55 // pred_fallthru
          _
      $region56: #{nnmod_forward.3} parent=5 // pred_fallthru
        _
    $region6: #{nnmod_forward.3} parent=1 // loop_footer
      %s21 = sadd.s32 1, %s17
    $region7: #{nnmod_forward.3} parent=1 // loop_footer_branch
      %16 = sbr.rel target = $region3
    $region8: #{nnmod_forward.3} parent=1 // loop_exit
      _
    %1092 = vsyncpa [#allocation4], 1
    %s1093 = scalar_lea.sflag [#allocation4], 1
    %1094 = vsyncpa %s1093, 1

</llo_original>
